<compile_context>
chip_gen: v7x
topology: tpu7x:2x2x1
jax: 0.10.0
libtpu: 0.0.40
codegen_flags: <defaults>
</compile_context>

<pallas_src>
import jax
import jax.numpy as jnp
from jax import lax
from jax.experimental import pallas as pl
from jax.experimental.pallas import tpu as pltpu

# ---- small, module-consistent config -------------------------------------
B = 2          # batch
W = 16         # window_size
C = 4          # nb_channels
F = 16         # nb_filters
FW = 3         # filter_width
H = 32         # nb_units_lstm
NCLS = 7       # nb_classes
T_FINAL = W - 4 * (FW - 1)   # final_seq_len after 4 VALID convs = 8

# conv_pack row offsets (all 8-aligned so in-kernel slices start on sublane tiles)
_CB_OFF = 0                    # (4, F)     conv biases b1..b4
_W1_OFF = 8                    # (FW, F)    conv1 weight (Cin = 1)
_W2_OFF = 16                   # (FW*F, F)  conv2 im2col weight
_W3_OFF = 64                   # (FW*F, F)
_W4_OFF = 112                  # (FW*F, F)
_CONV_ROWS = 160

# lstm_pack row offsets (lane width 4H = 128)
_WIH_OFF = 0                   # (C*F, 4H)  rows ordered c*F + f
_WHH_OFF = 64                  # (H, 4H)
_BG_OFF = 96                   # (1, 4H)    b_ih + b_hh
_WFC_OFF = 104                 # (H, 4H)    fc weight, lanes >= NCLS zero-padded
_BFC_OFF = 136                 # (1, 4H)
_LSTM_ROWS = 137


# ---- Pallas kernel ---------------------------------------------------------
def _conv_relu_im2col(act, w_s, bias):
    # act: (N, T_in, F); w_s: (FW*F, F) stacked k-major; bias: (1, F)
    n, t_in, f_in = act.shape
    t_out = t_in - FW + 1
    cols = jnp.concatenate([act[:, k:k + t_out, :] for k in range(FW)], axis=-1)
    y = jnp.dot(cols.reshape(n * t_out, FW * f_in), w_s,
                preferred_element_type=jnp.float32) + bias
    return jnp.maximum(y, 0.0).reshape(n, t_out, F)


def _deepconvlstm_kernel(x_ref, conv_ref, lstm_ref, out_ref):
    # layout: x_ref (B*C, W, 1) f32; conv_ref (_CONV_ROWS, F); lstm_ref (_LSTM_ROWS, 4H)
    # out_ref (B, NCLS) f32
    x = x_ref[...]

    cb = conv_ref[_CB_OFF:_CB_OFF + 4, :]            # (4, F) conv biases
    w1 = conv_ref[_W1_OFF:_W1_OFF + FW, :]           # (FW, F)
    w2 = conv_ref[_W2_OFF:_W2_OFF + FW * F, :]       # (FW*F, F)
    w3 = conv_ref[_W3_OFF:_W3_OFF + FW * F, :]
    w4 = conv_ref[_W4_OFF:_W4_OFF + FW * F, :]

    # conv1 (Cin=1): VPU broadcast multiply-accumulate (a K=1 matmul would be
    # a full-latency MXU pass for almost no arithmetic).
    n = B * C
    t1 = W - FW + 1
    acc = jnp.broadcast_to(cb[0:1, :].reshape(1, 1, F), (n, t1, F))
    for k in range(FW):                               # static, FW = 3
        acc = acc + x[:, k:k + t1, :] * w1[k].reshape(1, 1, F)
    act = jnp.maximum(acc, 0.0)                       # (N, 14, F)

    # convs 2-4: one im2col matmul each (K = FW*F = 48).
    act = _conv_relu_im2col(act, w2, cb[1:2, :])      # (N, 12, F)
    act = _conv_relu_im2col(act, w3, cb[2:3, :])      # (N, 10, F)
    act = _conv_relu_im2col(act, w4, cb[3:4, :])      # (N,  8, F)

    wih = lstm_ref[_WIH_OFF:_WIH_OFF + C * F, :]      # (C*F, 4H), rows ordered c*F+f
    whh = lstm_ref[_WHH_OFF:_WHH_OFF + H, :]          # (H, 4H)
    bg = lstm_ref[_BG_OFF:_BG_OFF + 1, :]             # (1, 4H)
    wfc = lstm_ref[_WFC_OFF:_WFC_OFF + H, :]          # (H, 4H) zero-padded past NCLS
    bfc = lstm_ref[_BFC_OFF:_BFC_OFF + 1, :]          # (1, 4H)

    # LSTM input projection for ALL steps at once, hoisted out of the recurrence:
    # one (B*T, C*F) @ (C*F, 4H) matmul; per-step slices are taken inside the loop.
    t = T_FINAL
    act4 = act.reshape(B, C, t, F)
    xcat = jnp.concatenate([act4[:, ci] for ci in range(C)], axis=-1)   # (B, t, C*F)
    gates_x = jnp.dot(xcat.reshape(B * t, C * F), wih,
                      preferred_element_type=jnp.float32) + bg          # (B*t, 4H)

    # nn.LSTM (seq-first): sequence axis = original batch B, "batch" axis = T.
    lane = lax.broadcasted_iota(jnp.int32, (t, 4 * H), 1)
    g_sel = (lane >= 2 * H) & (lane < 3 * H)          # tanh quarter (hoisted)

    h = jnp.zeros((t, H), jnp.float32)
    c = jnp.zeros((t, H), jnp.float32)
    h_last = []
    for b in range(B):                                # static unrolled recurrence
        gates = gates_x[b * t:(b + 1) * t, :] + jnp.dot(
            h, whh, preferred_element_type=jnp.float32)                 # (t, 4H)
        # Two full-vreg EUP calls + one select instead of four 32-lane slices.
        a = jnp.where(g_sel, jnp.tanh(gates), jax.nn.sigmoid(gates))
        ig = a[:, 0:H]
        fg = a[:, H:2 * H]
        gg = a[:, 2 * H:3 * H]
        og = a[:, 3 * H:4 * H]
        c = fg * c + ig * gg
        h = og * jnp.tanh(c)
        # dropout is identity (eval mode)
        # TODO(synk): training-mode dropout (pltpu.prng_random_bits mask) not implemented.
        h_last.append(h[t - 1:t, :])                  # only row T-1 feeds the output

    # Final FC once, outside the loop; single store of the (B, NCLS) result.
    y = jnp.dot(jnp.concatenate(h_last, axis=0), wfc,
                preferred_element_type=jnp.float32) + bfc               # (B, 4H)
    out_ref[...] = y[:, :NCLS]


# ---- wrapper ---------------------------------------------------------------
def _im2col_weight(w):
    # torch conv weight (F_out, Cin, fw, 1) -> (fw*Cin, F_out), row index k*Cin + cin
    f_out, cin, fw, _ = w.shape
    return jnp.transpose(w[:, :, :, 0], (2, 1, 0)).reshape(fw * cin, f_out)


def forward_pallas(x, params):
    # x: (B, W, C) f32 -> (B*C, W, 1): one independent conv column per (batch, sensor)
    x_k = jnp.transpose(x, (0, 2, 1)).reshape(B * C, W, 1)

    # --- pack all conv params into one (160, F) slab (8-row-aligned sections) ---
    cb = jnp.stack([params['conv1_b'], params['conv2_b'],
                    params['conv3_b'], params['conv4_b']], axis=0)        # (4, F)
    w1 = _im2col_weight(params['conv1_w'])                                # (3, F)
    w2 = _im2col_weight(params['conv2_w'])                                # (48, F)
    w3 = _im2col_weight(params['conv3_w'])
    w4 = _im2col_weight(params['conv4_w'])
    conv_pack = jnp.concatenate([
        cb, jnp.zeros((_W1_OFF - 4, F), jnp.float32),
        w1, jnp.zeros((_W2_OFF - _W1_OFF - FW, F), jnp.float32),
        w2, w3, w4], axis=0)
    assert conv_pack.shape == (_CONV_ROWS, F)

    # --- pack LSTM + FC params into one (137, 4H) slab ---
    # torch W_ih input features are ordered f*C + c; re-order the rows of W_ih^T
    # to c*F + f so they match the lane order of the in-kernel channel concat.
    wih = params['w_ih'].T.reshape(F, C, 4 * H).transpose(1, 0, 2).reshape(C * F, 4 * H)
    whh = params['w_hh'].T                                                # (H, 4H)
    bg = (params['b_ih'] + params['b_hh']).reshape(1, 4 * H)
    wfc = jnp.pad(params['fc_w'].T, ((0, 0), (0, 4 * H - NCLS)))          # (H, 4H)
    bfc = jnp.pad(params['fc_b'].reshape(1, NCLS), ((0, 0), (0, 4 * H - NCLS)))
    lstm_pack = jnp.concatenate([
        wih, whh, bg,
        jnp.zeros((_WFC_OFF - _BG_OFF - 1, 4 * H), jnp.float32),
        wfc, bfc], axis=0)
    assert lstm_pack.shape == (_LSTM_ROWS, 4 * H)

    vmem = pl.BlockSpec(memory_space=pltpu.MemorySpace.VMEM)
    return pl.pallas_call(
        _deepconvlstm_kernel,
        out_shape=jax.ShapeDtypeStruct((B, NCLS), jnp.float32),
        in_specs=[vmem, vmem, vmem],
        out_specs=vmem,
    )(x_k, conv_pack, lstm_pack)


# ---- pure-JAX reference (mirrors the PyTorch forward) ----------------------
def forward_ref(x, params):
    a = x.reshape(B, 1, W, C)
    for i in range(1, 5):
        w = params[f'conv{i}_w']
        b = params[f'conv{i}_b']
        a = lax.conv_general_dilated(
            a, w, (1, 1), 'VALID',
            dimension_numbers=('NCHW', 'OIHW', 'NCHW'))
        a = jnp.maximum(a + b[None, :, None, None], 0.0)
    t = a.shape[2]
    a = jnp.transpose(a, (0, 2, 1, 3)).reshape(B, t, F * C)

    w_ih, w_hh = params['w_ih'], params['w_hh']
    b_ih, b_hh = params['b_ih'], params['b_hh']

    def step(carry, x_s):
        h, c = carry
        gates = x_s @ w_ih.T + b_ih + h @ w_hh.T + b_hh
        i, f, g, o = jnp.split(gates, 4, axis=-1)
        i = jax.nn.sigmoid(i); f = jax.nn.sigmoid(f)
        g = jnp.tanh(g); o = jax.nn.sigmoid(o)
        c = f * c + i * g
        h = o * jnp.tanh(c)
        return (h, c), h

    h0 = jnp.zeros((t, H), jnp.float32)
    c0 = jnp.zeros((t, H), jnp.float32)
    _, hs = lax.scan(step, (h0, c0), a)          # (B, t, H)
    y = hs.reshape(-1, H) @ params['fc_w'].T + params['fc_b']
    return y.reshape(B, t, NCLS)[:, -1, :]


# ---- deterministic parameter construction ----------------------------------
def make_params(key):
    ks = jax.random.split(key, 16)
    p = {}
    p['conv1_w'] = jax.random.normal(ks[0], (F, 1, FW, 1), jnp.float32) / jnp.sqrt(1.0 * FW)
    p['conv1_b'] = 0.1 * jax.random.normal(ks[1], (F,), jnp.float32)
    for i, (kw, kb) in zip((2, 3, 4), ((ks[2], ks[3]), (ks[4], ks[5]), (ks[6], ks[7]))):
        p[f'conv{i}_w'] = jax.random.normal(kw, (F, F, FW, 1), jnp.float32) / jnp.sqrt(F * FW)
        p[f'conv{i}_b'] = 0.1 * jax.random.normal(kb, (F,), jnp.float32)
    p['w_ih'] = jax.random.normal(ks[8], (4 * H, F * C), jnp.float32) / jnp.sqrt(F * C)
    p['w_hh'] = jax.random.normal(ks[9], (4 * H, H), jnp.float32) / jnp.sqrt(H)
    p['b_ih'] = 0.1 * jax.random.normal(ks[10], (4 * H,), jnp.float32)
    p['b_hh'] = 0.1 * jax.random.normal(ks[11], (4 * H,), jnp.float32)
    p['fc_w'] = jax.random.normal(ks[12], (NCLS, H), jnp.float32) / jnp.sqrt(H)
    p['fc_b'] = 0.1 * jax.random.normal(ks[13], (NCLS,), jnp.float32)
    return p


if __name__ == "__main__":
    key = jax.random.PRNGKey(0)
    k_x, k_p = jax.random.split(key)
    x = jax.random.normal(k_x, (B, W, C), jnp.float32)
    params = make_params(k_p)

    out = forward_pallas(x, params)
    out = jax.block_until_ready(out)

    ref = jax.block_until_ready(forward_ref(x, params))
    assert out.shape == (B, NCLS)
    assert jnp.allclose(out, ref, rtol=2e-4, atol=2e-4), (out, ref)

    print("KERNEL_OK")
</pallas_src>

<mosaic_0001>
module attributes {stable_mosaic.version = 11 : i64} {
  func.func @_deepconvlstm_kernel(%arg0: memref<8x16x1xf32, #tpu.memory_space<vmem>>, %arg1: memref<160x16xf32, #tpu.memory_space<vmem>>, %arg2: memref<137x128xf32, #tpu.memory_space<vmem>>, %arg3: memref<2x7xf32, #tpu.memory_space<vmem>>) attributes {dimension_semantics = [], scalar_prefetch = 0 : i64, scratch_operands = 0 : i64, tpu.core_type = #tpu.core_type<tc>} {
    %c0 = arith.constant 0 : index
    %c0_0 = arith.constant 0 : index
    %c0_1 = arith.constant 0 : index
    %0 = vector.load %arg0[%c0, %c0_0, %c0_1] : memref<8x16x1xf32, #tpu.memory_space<vmem>>, vector<8x16x1xf32>
    %c0_2 = arith.constant 0 : index
    %c0_3 = arith.constant 0 : index
    %1 = vector.load %arg1[%c0_2, %c0_3] : memref<160x16xf32, #tpu.memory_space<vmem>>, vector<4x16xf32>
    %c8 = arith.constant 8 : index
    %c0_4 = arith.constant 0 : index
    %2 = vector.load %arg1[%c8, %c0_4] : memref<160x16xf32, #tpu.memory_space<vmem>>, vector<3x16xf32>
    %c16 = arith.constant 16 : index
    %c0_5 = arith.constant 0 : index
    %3 = vector.load %arg1[%c16, %c0_5] : memref<160x16xf32, #tpu.memory_space<vmem>>, vector<48x16xf32>
    %c64 = arith.constant 64 : index
    %c0_6 = arith.constant 0 : index
    %4 = vector.load %arg1[%c64, %c0_6] : memref<160x16xf32, #tpu.memory_space<vmem>>, vector<48x16xf32>
    %c112 = arith.constant 112 : index
    %c0_7 = arith.constant 0 : index
    %5 = vector.load %arg1[%c112, %c0_7] : memref<160x16xf32, #tpu.memory_space<vmem>>, vector<48x16xf32>
    %6 = vector.extract_strided_slice %1 {offsets = [0, 0], sizes = [1, 16], strides = [1, 1]} : vector<4x16xf32> to vector<1x16xf32>
    %7 = vector.shape_cast %6 : vector<1x16xf32> to vector<1x1x16xf32>
    %8 = vector.shape_cast %7 : vector<1x1x16xf32> to vector<1x1x16xf32>
    %9 = vector.broadcast %8 : vector<1x1x16xf32> to vector<8x14x16xf32>
    %10 = vector.extract_strided_slice %0 {offsets = [0, 0, 0], sizes = [8, 14, 1], strides = [1, 1, 1]} : vector<8x16x1xf32> to vector<8x14x1xf32>
    %11 = vector.extract_strided_slice %2 {offsets = [0, 0], sizes = [1, 16], strides = [1, 1]} : vector<3x16xf32> to vector<1x16xf32>
    %12 = vector.shape_cast %11 : vector<1x16xf32> to vector<16xf32>
    %13 = vector.shape_cast %12 : vector<16xf32> to vector<1x1x16xf32>
    %14 = vector.broadcast %10 : vector<8x14x1xf32> to vector<8x14x16xf32>
    %15 = vector.broadcast %13 : vector<1x1x16xf32> to vector<8x14x16xf32>
    %16 = arith.mulf %14, %15 : vector<8x14x16xf32>
    %17 = arith.addf %9, %16 : vector<8x14x16xf32>
    %18 = vector.extract_strided_slice %0 {offsets = [0, 1, 0], sizes = [8, 14, 1], strides = [1, 1, 1]} : vector<8x16x1xf32> to vector<8x14x1xf32>
    %19 = vector.extract_strided_slice %2 {offsets = [1, 0], sizes = [1, 16], strides = [1, 1]} : vector<3x16xf32> to vector<1x16xf32>
    %20 = vector.shape_cast %19 : vector<1x16xf32> to vector<16xf32>
    %21 = vector.shape_cast %20 : vector<16xf32> to vector<1x1x16xf32>
    %22 = vector.broadcast %18 : vector<8x14x1xf32> to vector<8x14x16xf32>
    %23 = vector.broadcast %21 : vector<1x1x16xf32> to vector<8x14x16xf32>
    %24 = arith.mulf %22, %23 : vector<8x14x16xf32>
    %25 = arith.addf %17, %24 : vector<8x14x16xf32>
    %26 = vector.extract_strided_slice %0 {offsets = [0, 2, 0], sizes = [8, 14, 1], strides = [1, 1, 1]} : vector<8x16x1xf32> to vector<8x14x1xf32>
    %27 = vector.extract_strided_slice %2 {offsets = [2, 0], sizes = [1, 16], strides = [1, 1]} : vector<3x16xf32> to vector<1x16xf32>
    %28 = vector.shape_cast %27 : vector<1x16xf32> to vector<16xf32>
    %29 = vector.shape_cast %28 : vector<16xf32> to vector<1x1x16xf32>
    %30 = vector.broadcast %26 : vector<8x14x1xf32> to vector<8x14x16xf32>
    %31 = vector.broadcast %29 : vector<1x1x16xf32> to vector<8x14x16xf32>
    %32 = arith.mulf %30, %31 : vector<8x14x16xf32>
    %33 = arith.addf %25, %32 : vector<8x14x16xf32>
    %cst = arith.constant 0.000000e+00 : f32
    %34 = vector.broadcast %cst : f32 to vector<8x14x16xf32>
    %35 = arith.maximumf %33, %34 : vector<8x14x16xf32>
    %36 = vector.extract_strided_slice %1 {offsets = [1, 0], sizes = [1, 16], strides = [1, 1]} : vector<4x16xf32> to vector<1x16xf32>
    %37 = vector.extract_strided_slice %35 {offsets = [0, 0, 0], sizes = [8, 12, 16], strides = [1, 1, 1]} : vector<8x14x16xf32> to vector<8x12x16xf32>
    %38 = vector.extract_strided_slice %35 {offsets = [0, 1, 0], sizes = [8, 12, 16], strides = [1, 1, 1]} : vector<8x14x16xf32> to vector<8x12x16xf32>
    %39 = vector.extract_strided_slice %35 {offsets = [0, 2, 0], sizes = [8, 12, 16], strides = [1, 1, 1]} : vector<8x14x16xf32> to vector<8x12x16xf32>
    %40 = tpu.concatenate %37, %38, %39 in 2 : vector<8x12x16xf32>, vector<8x12x16xf32>, vector<8x12x16xf32> -> vector<8x12x48xf32>
    %41 = vector.shape_cast %40 : vector<8x12x48xf32> to vector<96x48xf32>
    %cst_8 = arith.constant dense<0.000000e+00> : vector<96x16xf32>
    %42 = tpu.matmul %41, %3, %cst_8 {dimension_numbers = #tpu.dot_dimension_numbers<[1], [0], [0], [1], [0, 0, 1, 1], [], []>} : vector<96x48xf32>, vector<48x16xf32>, vector<96x16xf32> -> vector<96x16xf32>
    %43 = vector.broadcast %36 : vector<1x16xf32> to vector<96x16xf32>
    %44 = arith.addf %42, %43 : vector<96x16xf32>
    %cst_9 = arith.constant 0.000000e+00 : f32
    %45 = vector.broadcast %cst_9 : f32 to vector<96x16xf32>
    %46 = arith.maximumf %44, %45 : vector<96x16xf32>
    %47 = vector.shape_cast %46 : vector<96x16xf32> to vector<8x12x16xf32>
    %48 = vector.extract_strided_slice %1 {offsets = [2, 0], sizes = [1, 16], strides = [1, 1]} : vector<4x16xf32> to vector<1x16xf32>
    %49 = vector.extract_strided_slice %47 {offsets = [0, 0, 0], sizes = [8, 10, 16], strides = [1, 1, 1]} : vector<8x12x16xf32> to vector<8x10x16xf32>
    %50 = vector.extract_strided_slice %47 {offsets = [0, 1, 0], sizes = [8, 10, 16], strides = [1, 1, 1]} : vector<8x12x16xf32> to vector<8x10x16xf32>
    %51 = vector.extract_strided_slice %47 {offsets = [0, 2, 0], sizes = [8, 10, 16], strides = [1, 1, 1]} : vector<8x12x16xf32> to vector<8x10x16xf32>
    %52 = tpu.concatenate %49, %50, %51 in 2 : vector<8x10x16xf32>, vector<8x10x16xf32>, vector<8x10x16xf32> -> vector<8x10x48xf32>
    %53 = vector.shape_cast %52 : vector<8x10x48xf32> to vector<80x48xf32>
    %cst_10 = arith.constant dense<0.000000e+00> : vector<80x16xf32>
    %54 = tpu.matmul %53, %4, %cst_10 {dimension_numbers = #tpu.dot_dimension_numbers<[1], [0], [0], [1], [0, 0, 1, 1], [], []>} : vector<80x48xf32>, vector<48x16xf32>, vector<80x16xf32> -> vector<80x16xf32>
    %55 = vector.broadcast %48 : vector<1x16xf32> to vector<80x16xf32>
    %56 = arith.addf %54, %55 : vector<80x16xf32>
    %cst_11 = arith.constant 0.000000e+00 : f32
    %57 = vector.broadcast %cst_11 : f32 to vector<80x16xf32>
    %58 = arith.maximumf %56, %57 : vector<80x16xf32>
    %59 = vector.shape_cast %58 : vector<80x16xf32> to vector<8x10x16xf32>
    %60 = vector.extract_strided_slice %1 {offsets = [3, 0], sizes = [1, 16], strides = [1, 1]} : vector<4x16xf32> to vector<1x16xf32>
    %61 = vector.extract_strided_slice %59 {offsets = [0, 0, 0], sizes = [8, 8, 16], strides = [1, 1, 1]} : vector<8x10x16xf32> to vector<8x8x16xf32>
    %62 = vector.extract_strided_slice %59 {offsets = [0, 1, 0], sizes = [8, 8, 16], strides = [1, 1, 1]} : vector<8x10x16xf32> to vector<8x8x16xf32>
    %63 = vector.extract_strided_slice %59 {offsets = [0, 2, 0], sizes = [8, 8, 16], strides = [1, 1, 1]} : vector<8x10x16xf32> to vector<8x8x16xf32>
    %64 = tpu.concatenate %61, %62, %63 in 2 : vector<8x8x16xf32>, vector<8x8x16xf32>, vector<8x8x16xf32> -> vector<8x8x48xf32>
    %65 = vector.shape_cast %64 : vector<8x8x48xf32> to vector<64x48xf32>
    %cst_12 = arith.constant dense<0.000000e+00> : vector<64x16xf32>
    %66 = tpu.matmul %65, %5, %cst_12 {dimension_numbers = #tpu.dot_dimension_numbers<[1], [0], [0], [1], [0, 0, 1, 1], [], []>} : vector<64x48xf32>, vector<48x16xf32>, vector<64x16xf32> -> vector<64x16xf32>
    %67 = vector.broadcast %60 : vector<1x16xf32> to vector<64x16xf32>
    %68 = arith.addf %66, %67 : vector<64x16xf32>
    %cst_13 = arith.constant 0.000000e+00 : f32
    %69 = vector.broadcast %cst_13 : f32 to vector<64x16xf32>
    %70 = arith.maximumf %68, %69 : vector<64x16xf32>
    %71 = vector.shape_cast %70 : vector<64x16xf32> to vector<8x8x16xf32>
    %c0_14 = arith.constant 0 : index
    %c0_15 = arith.constant 0 : index
    %72 = vector.load %arg2[%c0_14, %c0_15] : memref<137x128xf32, #tpu.memory_space<vmem>>, vector<64x128xf32>
    %c64_16 = arith.constant 64 : index
    %c0_17 = arith.constant 0 : index
    %73 = vector.load %arg2[%c64_16, %c0_17] : memref<137x128xf32, #tpu.memory_space<vmem>>, vector<32x128xf32>
    %c96 = arith.constant 96 : index
    %c0_18 = arith.constant 0 : index
    %74 = vector.load %arg2[%c96, %c0_18] : memref<137x128xf32, #tpu.memory_space<vmem>>, vector<1x128xf32>
    %c104 = arith.constant 104 : index
    %c0_19 = arith.constant 0 : index
    %75 = vector.load %arg2[%c104, %c0_19] : memref<137x128xf32, #tpu.memory_space<vmem>>, vector<32x128xf32>
    %c136 = arith.constant 136 : index
    %c0_20 = arith.constant 0 : index
    %76 = vector.load %arg2[%c136, %c0_20] : memref<137x128xf32, #tpu.memory_space<vmem>>, vector<1x128xf32>
    %77 = vector.shape_cast %71 : vector<8x8x16xf32> to vector<2x4x8x16xf32>
    %78 = vector.extract_strided_slice %77 {offsets = [0, 0, 0, 0], sizes = [2, 1, 8, 16], strides = [1, 1, 1, 1]} : vector<2x4x8x16xf32> to vector<2x1x8x16xf32>
    %79 = vector.shape_cast %78 : vector<2x1x8x16xf32> to vector<2x8x16xf32>
    %80 = vector.extract_strided_slice %77 {offsets = [0, 1, 0, 0], sizes = [2, 1, 8, 16], strides = [1, 1, 1, 1]} : vector<2x4x8x16xf32> to vector<2x1x8x16xf32>
    %81 = vector.shape_cast %80 : vector<2x1x8x16xf32> to vector<2x8x16xf32>
    %82 = vector.extract_strided_slice %77 {offsets = [0, 2, 0, 0], sizes = [2, 1, 8, 16], strides = [1, 1, 1, 1]} : vector<2x4x8x16xf32> to vector<2x1x8x16xf32>
    %83 = vector.shape_cast %82 : vector<2x1x8x16xf32> to vector<2x8x16xf32>
    %84 = vector.extract_strided_slice %77 {offsets = [0, 3, 0, 0], sizes = [2, 1, 8, 16], strides = [1, 1, 1, 1]} : vector<2x4x8x16xf32> to vector<2x1x8x16xf32>
    %85 = vector.shape_cast %84 : vector<2x1x8x16xf32> to vector<2x8x16xf32>
    %86 = tpu.concatenate %79, %81, %83, %85 in 2 : vector<2x8x16xf32>, vector<2x8x16xf32>, vector<2x8x16xf32>, vector<2x8x16xf32> -> vector<2x8x64xf32>
    %87 = vector.shape_cast %86 : vector<2x8x64xf32> to vector<16x64xf32>
    %cst_21 = arith.constant dense<0.000000e+00> : vector<16x128xf32>
    %88 = tpu.matmul %87, %72, %cst_21 {dimension_numbers = #tpu.dot_dimension_numbers<[1], [0], [0], [1], [0, 0, 1, 1], [], []>} : vector<16x64xf32>, vector<64x128xf32>, vector<16x128xf32> -> vector<16x128xf32>
    %89 = vector.broadcast %74 : vector<1x128xf32> to vector<16x128xf32>
    %90 = arith.addf %88, %89 : vector<16x128xf32>
    %91 = tpu.iota {dimensions = array<i32: 1>} : vector<8x128xi32>
    %c64_i32 = arith.constant 64 : i32
    %92 = vector.broadcast %c64_i32 : i32 to vector<8x128xi32>
    %93 = arith.cmpi sge, %91, %92 : vector<8x128xi32>
    %c96_i32 = arith.constant 96 : i32
    %94 = vector.broadcast %c96_i32 : i32 to vector<8x128xi32>
    %95 = arith.cmpi slt, %91, %94 : vector<8x128xi32>
    %96 = arith.andi %93, %95 : vector<8x128xi1>
    %cst_22 = arith.constant 0.000000e+00 : f32
    %97 = vector.broadcast %cst_22 : f32 to vector<8x32xf32>
    %cst_23 = arith.constant 0.000000e+00 : f32
    %98 = vector.broadcast %cst_23 : f32 to vector<8x32xf32>
    %99 = vector.extract_strided_slice %90 {offsets = [0, 0], sizes = [8, 128], strides = [1, 1]} : vector<16x128xf32> to vector<8x128xf32>
    %cst_24 = arith.constant dense<0.000000e+00> : vector<8x128xf32>
    %100 = tpu.matmul %97, %73, %cst_24 {dimension_numbers = #tpu.dot_dimension_numbers<[1], [0], [0], [1], [0, 0, 1, 1], [], []>} : vector<8x32xf32>, vector<32x128xf32>, vector<8x128xf32> -> vector<8x128xf32>
    %101 = arith.addf %99, %100 : vector<8x128xf32>
    %102 = math.tanh %101 : vector<8x128xf32>
    %103 = arith.negf %101 : vector<8x128xf32>
    %104 = math.exp %103 : vector<8x128xf32>
    %cst_25 = arith.constant 1.000000e+00 : f32
    %105 = vector.broadcast %cst_25 : f32 to vector<8x128xf32>
    %106 = arith.addf %105, %104 : vector<8x128xf32>
    %107 = arith.divf %105, %106 : vector<8x128xf32>
    %108 = arith.select %96, %102, %107 : vector<8x128xi1>, vector<8x128xf32>
    %109 = vector.extract_strided_slice %108 {offsets = [0, 0], sizes = [8, 32], strides = [1, 1]} : vector<8x128xf32> to vector<8x32xf32>
    %110 = vector.extract_strided_slice %108 {offsets = [0, 32], sizes = [8, 32], strides = [1, 1]} : vector<8x128xf32> to vector<8x32xf32>
    %111 = vector.extract_strided_slice %108 {offsets = [0, 64], sizes = [8, 32], strides = [1, 1]} : vector<8x128xf32> to vector<8x32xf32>
    %112 = vector.extract_strided_slice %108 {offsets = [0, 96], sizes = [8, 32], strides = [1, 1]} : vector<8x128xf32> to vector<8x32xf32>
    %113 = arith.mulf %110, %98 : vector<8x32xf32>
    %114 = arith.mulf %109, %111 : vector<8x32xf32>
    %115 = arith.addf %113, %114 : vector<8x32xf32>
    %116 = math.tanh %115 : vector<8x32xf32>
    %117 = arith.mulf %112, %116 : vector<8x32xf32>
    %118 = vector.extract_strided_slice %117 {offsets = [7, 0], sizes = [1, 32], strides = [1, 1]} : vector<8x32xf32> to vector<1x32xf32>
    %119 = vector.extract_strided_slice %90 {offsets = [8, 0], sizes = [8, 128], strides = [1, 1]} : vector<16x128xf32> to vector<8x128xf32>
    %cst_26 = arith.constant dense<0.000000e+00> : vector<8x128xf32>
    %120 = tpu.matmul %117, %73, %cst_26 {dimension_numbers = #tpu.dot_dimension_numbers<[1], [0], [0], [1], [0, 0, 1, 1], [], []>} : vector<8x32xf32>, vector<32x128xf32>, vector<8x128xf32> -> vector<8x128xf32>
    %121 = arith.addf %119, %120 : vector<8x128xf32>
    %122 = math.tanh %121 : vector<8x128xf32>
    %123 = arith.negf %121 : vector<8x128xf32>
    %124 = math.exp %123 : vector<8x128xf32>
    %cst_27 = arith.constant 1.000000e+00 : f32
    %125 = vector.broadcast %cst_27 : f32 to vector<8x128xf32>
    %126 = arith.addf %125, %124 : vector<8x128xf32>
    %127 = arith.divf %125, %126 : vector<8x128xf32>
    %128 = arith.select %96, %122, %127 : vector<8x128xi1>, vector<8x128xf32>
    %129 = vector.extract_strided_slice %128 {offsets = [0, 0], sizes = [8, 32], strides = [1, 1]} : vector<8x128xf32> to vector<8x32xf32>
    %130 = vector.extract_strided_slice %128 {offsets = [0, 32], sizes = [8, 32], strides = [1, 1]} : vector<8x128xf32> to vector<8x32xf32>
    %131 = vector.extract_strided_slice %128 {offsets = [0, 64], sizes = [8, 32], strides = [1, 1]} : vector<8x128xf32> to vector<8x32xf32>
    %132 = vector.extract_strided_slice %128 {offsets = [0, 96], sizes = [8, 32], strides = [1, 1]} : vector<8x128xf32> to vector<8x32xf32>
    %133 = arith.mulf %130, %115 : vector<8x32xf32>
    %134 = arith.mulf %129, %131 : vector<8x32xf32>
    %135 = arith.addf %133, %134 : vector<8x32xf32>
    %136 = math.tanh %135 : vector<8x32xf32>
    %137 = arith.mulf %132, %136 : vector<8x32xf32>
    %138 = vector.extract_strided_slice %137 {offsets = [7, 0], sizes = [1, 32], strides = [1, 1]} : vector<8x32xf32> to vector<1x32xf32>
    %139 = tpu.concatenate %118, %138 in 0 : vector<1x32xf32>, vector<1x32xf32> -> vector<2x32xf32>
    %cst_28 = arith.constant dense<0.000000e+00> : vector<2x128xf32>
    %140 = tpu.matmul %139, %75, %cst_28 {dimension_numbers = #tpu.dot_dimension_numbers<[1], [0], [0], [1], [0, 0, 1, 1], [], []>} : vector<2x32xf32>, vector<32x128xf32>, vector<2x128xf32> -> vector<2x128xf32>
    %141 = vector.broadcast %76 : vector<1x128xf32> to vector<2x128xf32>
    %142 = arith.addf %140, %141 : vector<2x128xf32>
    %143 = vector.extract_strided_slice %142 {offsets = [0, 0], sizes = [2, 7], strides = [1, 1]} : vector<2x128xf32> to vector<2x7xf32>
    %c0_29 = arith.constant 0 : index
    %c0_30 = arith.constant 0 : index
    %144 = vector.load %arg3[%c0_29, %c0_30] : memref<2x7xf32, #tpu.memory_space<vmem>>, vector<2x7xf32>
    tpu.vector_store %arg3[%c0_29, %c0_30], %143 {strides = array<i32>} : memref<2x7xf32, #tpu.memory_space<vmem>>, vector<2x7xf32>,
    return
  }
}

</mosaic_0001>

<llo_original>
// kernel: tpu_custom_call.1
$region0: #{tpu_custom_call.1}
  #allocation0 [shape = 'u32[]', space=smem, size = 0x4, offset = 0x4, fixed_abs, tag = 'smem constant byte address 0x4 - core index']
  #allocation1 [shape = 'u32[144,128]{1,0:T(1,128)}', space=vmem, size = 0x12000, scoped, tag = 'internal scratch']
  %s0 = inlined_call_operand.vmem [shape: f32[8,16,1], index: 0, kind: input, shape index: {}]
  %s1 = inlined_call_operand.vmem [shape: f32[160,16], index: 1, kind: input, shape index: {}]
  %s2 = inlined_call_operand.vmem [shape: f32[137,128], index: 2, kind: input, shape index: {}]
  %s3 = inlined_call_operand.hbm [shape: f32[2,7], index: 3, kind: output, shape index: {}]
  %s4 = sld [smem:[#allocation0]]
  $region22: #{tpu_custom_call.1} parent=0
    _
  %s6 = ssub.s32 1, %s4
  %s7 = scalar_select 0, %s6, %s4
  $region1: #{tpu_custom_call.1} parent=0
    #allocation2 [shape = 'u8[1024]{0}', space=vmem, size = 0x400, scoped, tag = 'output window, operand 0, single buffered']
    #allocation3 [shape = 's32[1]{0}', space=sflag, size = 0x4, scoped, tag = 'scoped memory for tpu_custom_call.1']
    %8 = vsyncpa [#allocation3], 0
    // Predicated region
    $region2: #{tpu_custom_call.1} parent=1 // pred_check
      _
    $region3: #{tpu_custom_call.1} parent=1 // pred_check_branch
      %10 = sbr.rel (0) target = $region5
    $region4: #{tpu_custom_call.1} parent=1 // pred_region
      _
    $region5: #{tpu_custom_call.1} parent=1 // pred_fallthru
      _
    // Predicated region
    $region6: #{tpu_custom_call.1} parent=1 // pred_check
      _
    $region7: #{tpu_custom_call.1} parent=1 // pred_check_branch
      %12 = sbr.rel (0) target = $region9
    $region8: #{tpu_custom_call.1} parent=1 // pred_region
      _
    $region9: #{tpu_custom_call.1} parent=1 // pred_fallthru
      _
    // Predicated region
    $region10: #{tpu_custom_call.1} parent=1 // pred_check
      _
    $region11: #{tpu_custom_call.1} parent=1 // pred_check_branch
      %14 = sbr.rel (0) target = $region13
    $region12: #{tpu_custom_call.1} parent=1 // pred_region
      _
    $region13: #{tpu_custom_call.1} parent=1 // pred_fallthru
      _
    %v15 = vld [vmem:[%s0] sm:$0xff]
    %v16 = vld [vmem:[%s0 + $0x8] sm:$0xff]
    %v17 = vld [vmem:[%s0 + $0x10] sm:$0xff]
    %v18 = vld [vmem:[%s0 + $0x18] sm:$0xff]
    %v19 = vld [vmem:[%s0 + $0x20] sm:$0xff]
    %v20 = vld [vmem:[%s0 + $0x28] sm:$0xff]
    %v21 = vld [vmem:[%s0 + $0x30] sm:$0xff]
    %v22 = vld [vmem:[%s0 + $0x38] sm:$0xff]
    %v23 = vld [vmem:[%s0 + $0x40] sm:$0xff]
    %v24 = vld [vmem:[%s0 + $0x48] sm:$0xff]
    %v25 = vld [vmem:[%s0 + $0x50] sm:$0xff]
    %v26 = vld [vmem:[%s0 + $0x58] sm:$0xff]
    %v27 = vld [vmem:[%s0 + $0x60] sm:$0xff]
    %v28 = vld [vmem:[%s0 + $0x68] sm:$0xff]
    %v29 = vld [vmem:[%s0 + $0x70] sm:$0xff]
    %v30 = vld [vmem:[%s0 + $0x78] sm:$0xff]
    %v31 = vld [vmem:[%s1] sm:$0xf]
    %v32 = vld [vmem:[%s1 + $0x8] sm:$0x7]
    %v33 = vld [vmem:[%s1 + $0x10] sm:$0xff]
    %v34 = vld [vmem:[%s1 + $0x18] sm:$0xff]
    %v35 = vld [vmem:[%s1 + $0x20] sm:$0xff]
    %v36 = vld [vmem:[%s1 + $0x28] sm:$0xff]
    %v37 = vld [vmem:[%s1 + $0x30] sm:$0xff]
    %v38 = vld [vmem:[%s1 + $0x38] sm:$0xff]
    %v39 = vld [vmem:[%s1 + $0x40] sm:$0xff]
    %v40 = vld [vmem:[%s1 + $0x48] sm:$0xff]
    %v41 = vld [vmem:[%s1 + $0x50] sm:$0xff]
    %v42 = vld [vmem:[%s1 + $0x58] sm:$0xff]
    %v43 = vld [vmem:[%s1 + $0x60] sm:$0xff]
    %v44 = vld [vmem:[%s1 + $0x68] sm:$0xff]
    %v45 = vld [vmem:[%s1 + $0x70] sm:$0xff]
    %v46 = vld [vmem:[%s1 + $0x78] sm:$0xff]
    %v47 = vld [vmem:[%s1 + $0x80] sm:$0xff]
    %v48 = vld [vmem:[%s1 + $0x88] sm:$0xff]
    %v49 = vld [vmem:[%s1 + $0x90] sm:$0xff]
    %v50 = vld [vmem:[%s1 + $0x98] sm:$0xff]
    %v51 = vlaneseq
    %v52 = vshrl.u32 %v51, 7
    %v53 = vsub.s32 0, %v52
    %v54 = vrot.slane %v31, %v53
    %56 = vset.pattern.permute.xlu0 0
    %57 = vperm.xlu0 %56, %v15
    %v58 = vpop.permute.xlu0 %57
    %61 = vset.pattern.permute.xlu0 0
    %62 = vperm.xlu0 %61, %v16
    %v63 = vpop.permute.xlu0 %62
    %66 = vset.pattern.permute.xlu0 0
    %67 = vperm.xlu0 %66, %v17
    %v68 = vpop.permute.xlu0 %67
    %71 = vset.pattern.permute.xlu0 0
    %72 = vperm.xlu0 %71, %v18
    %v73 = vpop.permute.xlu0 %72
    %76 = vset.pattern.permute.xlu0 0
    %77 = vperm.xlu0 %76, %v19
    %v78 = vpop.permute.xlu0 %77
    %81 = vset.pattern.permute.xlu0 0
    %82 = vperm.xlu0 %81, %v20
    %v83 = vpop.permute.xlu0 %82
    %86 = vset.pattern.permute.xlu0 0
    %87 = vperm.xlu0 %86, %v21
    %v88 = vpop.permute.xlu0 %87
    %91 = vset.pattern.permute.xlu0 0
    %92 = vperm.xlu0 %91, %v22
    %v93 = vpop.permute.xlu0 %92
    %96 = vset.pattern.permute.xlu0 0
    %97 = vperm.xlu0 %96, %v23
    %v98 = vpop.permute.xlu0 %97
    %101 = vset.pattern.permute.xlu0 0
    %102 = vperm.xlu0 %101, %v24
    %v103 = vpop.permute.xlu0 %102
    %106 = vset.pattern.permute.xlu0 0
    %107 = vperm.xlu0 %106, %v25
    %v108 = vpop.permute.xlu0 %107
    %111 = vset.pattern.permute.xlu0 0
    %112 = vperm.xlu0 %111, %v26
    %v113 = vpop.permute.xlu0 %112
    %116 = vset.pattern.permute.xlu0 0
    %117 = vperm.xlu0 %116, %v27
    %v118 = vpop.permute.xlu0 %117
    %121 = vset.pattern.permute.xlu0 0
    %122 = vperm.xlu0 %121, %v28
    %v123 = vpop.permute.xlu0 %122
    %126 = vset.pattern.permute.xlu0 0
    %127 = vperm.xlu0 %126, %v29
    %v128 = vpop.permute.xlu0 %127
    %131 = vset.pattern.permute.xlu0 0
    %132 = vperm.xlu0 %131, %v30
    %v133 = vpop.permute.xlu0 %132
    %v135 = vlaneseq
    %v136 = vshrl.u32 %v135, 7
    %v137 = vsub.s32 0, %v136
    %v138 = vrot.slane %v32, %v137
    %v139 = vmul.f32 %v58, %v138
    %v140 = vmul.f32 %v63, %v138
    %v141 = vmul.f32 %v68, %v138
    %v142 = vmul.f32 %v73, %v138
    %v143 = vmul.f32 %v78, %v138
    %v144 = vmul.f32 %v83, %v138
    %v145 = vmul.f32 %v88, %v138
    %v146 = vmul.f32 %v93, %v138
    %v147 = vmul.f32 %v98, %v138
    %v148 = vmul.f32 %v103, %v138
    %v149 = vmul.f32 %v108, %v138
    %v150 = vmul.f32 %v113, %v138
    %v151 = vmul.f32 %v118, %v138
    %v152 = vmul.f32 %v123, %v138
    %v153 = vmul.f32 %v128, %v138
    %v154 = vmul.f32 %v133, %v138
    %v155 = vadd.f32 %v54, %v139
    %v156 = vadd.f32 %v54, %v140
    %v157 = vadd.f32 %v54, %v141
    %v158 = vadd.f32 %v54, %v142
    %v159 = vadd.f32 %v54, %v143
    %v160 = vadd.f32 %v54, %v144
    %v161 = vadd.f32 %v54, %v145
    %v162 = vadd.f32 %v54, %v146
    %v163 = vadd.f32 %v54, %v147
    %v164 = vadd.f32 %v54, %v148
    %v165 = vadd.f32 %v54, %v149
    %v166 = vadd.f32 %v54, %v150
    %v167 = vadd.f32 %v54, %v151
    %v168 = vadd.f32 %v54, %v152
    %v169 = vadd.f32 %v54, %v153
    %v170 = vadd.f32 %v54, %v154
    %v171 = vlaneseq
    %v172 = vshrl.u32 %v171, 7
    %v173 = vsub.s32 1, %v172
    %v174 = vrot.slane %v32, %v173
    %v175 = vmul.f32 %v58, %v174
    %v176 = vmul.f32 %v63, %v174
    %v177 = vmul.f32 %v68, %v174
    %v178 = vmul.f32 %v73, %v174
    %v179 = vmul.f32 %v78, %v174
    %v180 = vmul.f32 %v83, %v174
    %v181 = vmul.f32 %v88, %v174
    %v182 = vmul.f32 %v93, %v174
    %v183 = vmul.f32 %v98, %v174
    %v184 = vmul.f32 %v103, %v174
    %v185 = vmul.f32 %v108, %v174
    %v186 = vmul.f32 %v113, %v174
    %v187 = vmul.f32 %v118, %v174
    %v188 = vmul.f32 %v123, %v174
    %v189 = vmul.f32 %v128, %v174
    %v190 = vmul.f32 %v133, %v174
    %vm207 = vcmask 1046528
    %v208 = vrot.slane %v175, 1
    %v209 = vrot.slane %v176, 1
    %v210 = vsel %vm207, %v208, %v209
    %v211 = vrot.slane %v177, 1
    %v212 = vrot.slane %v178, 1
    %v213 = vsel %vm207, %v211, %v212
    %v214 = vrot.slane %v179, 1
    %v215 = vrot.slane %v180, 1
    %v216 = vsel %vm207, %v214, %v215
    %v217 = vrot.slane %v181, 1
    %v218 = vrot.slane %v182, 1
    %v219 = vsel %vm207, %v217, %v218
    %v220 = vrot.slane %v183, 1
    %v221 = vrot.slane %v184, 1
    %v222 = vsel %vm207, %v220, %v221
    %v223 = vrot.slane %v185, 1
    %v224 = vrot.slane %v186, 1
    %v225 = vsel %vm207, %v223, %v224
    %v226 = vrot.slane %v187, 1
    %v227 = vrot.slane %v188, 1
    %v228 = vsel %vm207, %v226, %v227
    %v229 = vrot.slane %v189, 1
    %v230 = vrot.slane %v190, 1
    %v231 = vsel %vm207, %v229, %v230
    %v248 = vadd.f32 %v155, %v210
    %v249 = vadd.f32 %v156, %v209
    %v250 = vadd.f32 %v157, %v213
    %v251 = vadd.f32 %v158, %v212
    %v252 = vadd.f32 %v159, %v216
    %v253 = vadd.f32 %v160, %v215
    %v254 = vadd.f32 %v161, %v219
    %v255 = vadd.f32 %v162, %v218
    %v256 = vadd.f32 %v163, %v222
    %v257 = vadd.f32 %v164, %v221
    %v258 = vadd.f32 %v165, %v225
    %v259 = vadd.f32 %v166, %v224
    %v260 = vadd.f32 %v167, %v228
    %v261 = vadd.f32 %v168, %v227
    %v262 = vadd.f32 %v169, %v231
    %v263 = vadd.f32 %v170, %v230
    %v264 = vlaneseq
    %v265 = vshrl.u32 %v264, 7
    %v266 = vsub.s32 2, %v265
    %v267 = vrot.slane %v32, %v266
    %v268 = vmul.f32 %v58, %v267
    %v269 = vmul.f32 %v63, %v267
    %v270 = vmul.f32 %v68, %v267
    %v271 = vmul.f32 %v73, %v267
    %v272 = vmul.f32 %v78, %v267
    %v273 = vmul.f32 %v83, %v267
    %v274 = vmul.f32 %v88, %v267
    %v275 = vmul.f32 %v93, %v267
    %v276 = vmul.f32 %v98, %v267
    %v277 = vmul.f32 %v103, %v267
    %v278 = vmul.f32 %v108, %v267
    %v279 = vmul.f32 %v113, %v267
    %v280 = vmul.f32 %v118, %v267
    %v281 = vmul.f32 %v123, %v267
    %v282 = vmul.f32 %v128, %v267
    %v283 = vmul.f32 %v133, %v267
    %vm300 = vcmask 1045504
    %v301 = vrot.slane %v268, 2
    %v302 = vrot.slane %v269, 2
    %v303 = vsel %vm300, %v301, %v302
    %v304 = vrot.slane %v270, 2
    %v305 = vrot.slane %v271, 2
    %v306 = vsel %vm300, %v304, %v305
    %v307 = vrot.slane %v272, 2
    %v308 = vrot.slane %v273, 2
    %v309 = vsel %vm300, %v307, %v308
    %v310 = vrot.slane %v274, 2
    %v311 = vrot.slane %v275, 2
    %v312 = vsel %vm300, %v310, %v311
    %v313 = vrot.slane %v276, 2
    %v314 = vrot.slane %v277, 2
    %v315 = vsel %vm300, %v313, %v314
    %v316 = vrot.slane %v278, 2
    %v317 = vrot.slane %v279, 2
    %v318 = vsel %vm300, %v316, %v317
    %v319 = vrot.slane %v280, 2
    %v320 = vrot.slane %v281, 2
    %v321 = vsel %vm300, %v319, %v320
    %v322 = vrot.slane %v282, 2
    %v323 = vrot.slane %v283, 2
    %v324 = vsel %vm300, %v322, %v323
    %v341 = vadd.f32 %v248, %v303
    %v342 = vadd.f32 %v249, %v302
    %v343 = vadd.f32 %v250, %v306
    %v344 = vadd.f32 %v251, %v305
    %v345 = vadd.f32 %v252, %v309
    %v346 = vadd.f32 %v253, %v308
    %v347 = vadd.f32 %v254, %v312
    %v348 = vadd.f32 %v255, %v311
    %v349 = vadd.f32 %v256, %v315
    %v350 = vadd.f32 %v257, %v314
    %v351 = vadd.f32 %v258, %v318
    %v352 = vadd.f32 %v259, %v317
    %v353 = vadd.f32 %v260, %v321
    %v354 = vadd.f32 %v261, %v320
    %v355 = vadd.f32 %v262, %v324
    %v356 = vadd.f32 %v263, %v323
    %v357 = vmax.f32 %v341, 0.0
    %v358 = vmax.f32 %v342, 0.0
    %v359 = vmax.f32 %v343, 0.0
    %v360 = vmax.f32 %v344, 0.0
    %v361 = vmax.f32 %v345, 0.0
    %v362 = vmax.f32 %v346, 0.0
    %v363 = vmax.f32 %v347, 0.0
    %v364 = vmax.f32 %v348, 0.0
    %v365 = vmax.f32 %v349, 0.0
    %v366 = vmax.f32 %v350, 0.0
    %v367 = vmax.f32 %v351, 0.0
    %v368 = vmax.f32 %v352, 0.0
    %v369 = vmax.f32 %v353, 0.0
    %v370 = vmax.f32 %v354, 0.0
    %v371 = vmax.f32 %v355, 0.0
    %v372 = vmax.f32 %v356, 0.0
    %v389 = vrot.slane %v357, 1
    %v390 = vrot.slane %v358, 1
    %v391 = vsel %vm207, %v389, %v390
    %v392 = vrot.slane %v359, 1
    %v393 = vrot.slane %v360, 1
    %v394 = vsel %vm207, %v392, %v393
    %v395 = vrot.slane %v361, 1
    %v396 = vrot.slane %v362, 1
    %v397 = vsel %vm207, %v395, %v396
    %v398 = vrot.slane %v363, 1
    %v399 = vrot.slane %v364, 1
    %v400 = vsel %vm207, %v398, %v399
    %v401 = vrot.slane %v365, 1
    %v402 = vrot.slane %v366, 1
    %v403 = vsel %vm207, %v401, %v402
    %v404 = vrot.slane %v367, 1
    %v405 = vrot.slane %v368, 1
    %v406 = vsel %vm207, %v404, %v405
    %v407 = vrot.slane %v369, 1
    %v408 = vrot.slane %v370, 1
    %v409 = vsel %vm207, %v407, %v408
    %v410 = vrot.slane %v371, 1
    %v411 = vrot.slane %v372, 1
    %v412 = vsel %vm207, %v410, %v411
    %413 = vrot.lane.b32.xlu0 %v391, 16
    %v414 = vpop.permute.xlu0 %413
    %415 = vrot.lane.b32.xlu0 %v390, 16
    %v416 = vpop.permute.xlu0 %415
    %417 = vrot.lane.b32.xlu0 %v394, 16
    %v418 = vpop.permute.xlu0 %417
    %419 = vrot.lane.b32.xlu0 %v393, 16
    %v420 = vpop.permute.xlu0 %419
    %421 = vrot.lane.b32.xlu0 %v397, 16
    %v422 = vpop.permute.xlu0 %421
    %423 = vrot.lane.b32.xlu0 %v396, 16
    %v424 = vpop.permute.xlu0 %423
    %425 = vrot.lane.b32.xlu0 %v400, 16
    %v426 = vpop.permute.xlu0 %425
    %427 = vrot.lane.b32.xlu0 %v399, 16
    %v428 = vpop.permute.xlu0 %427
    %429 = vrot.lane.b32.xlu0 %v403, 16
    %v430 = vpop.permute.xlu0 %429
    %431 = vrot.lane.b32.xlu0 %v402, 16
    %v432 = vpop.permute.xlu0 %431
    %433 = vrot.lane.b32.xlu0 %v406, 16
    %v434 = vpop.permute.xlu0 %433
    %435 = vrot.lane.b32.xlu0 %v405, 16
    %v436 = vpop.permute.xlu0 %435
    %437 = vrot.lane.b32.xlu0 %v409, 16
    %v438 = vpop.permute.xlu0 %437
    %439 = vrot.lane.b32.xlu0 %v408, 16
    %v440 = vpop.permute.xlu0 %439
    %441 = vrot.lane.b32.xlu0 %v412, 16
    %v442 = vpop.permute.xlu0 %441
    %443 = vrot.lane.b32.xlu0 %v411, 16
    %v444 = vpop.permute.xlu0 %443
    %v461 = vrot.slane %v357, 2
    %v462 = vrot.slane %v358, 2
    %v463 = vsel %vm300, %v461, %v462
    %v464 = vrot.slane %v359, 2
    %v465 = vrot.slane %v360, 2
    %v466 = vsel %vm300, %v464, %v465
    %v467 = vrot.slane %v361, 2
    %v468 = vrot.slane %v362, 2
    %v469 = vsel %vm300, %v467, %v468
    %v470 = vrot.slane %v363, 2
    %v471 = vrot.slane %v364, 2
    %v472 = vsel %vm300, %v470, %v471
    %v473 = vrot.slane %v365, 2
    %v474 = vrot.slane %v366, 2
    %v475 = vsel %vm300, %v473, %v474
    %v476 = vrot.slane %v367, 2
    %v477 = vrot.slane %v368, 2
    %v478 = vsel %vm300, %v476, %v477
    %v479 = vrot.slane %v369, 2
    %v480 = vrot.slane %v370, 2
    %v481 = vsel %vm300, %v479, %v480
    %v482 = vrot.slane %v371, 2
    %v483 = vrot.slane %v372, 2
    %v484 = vsel %vm300, %v482, %v483
    %485 = vrot.lane.b32.xlu0 %v463, 32
    %v486 = vpop.permute.xlu0 %485
    %487 = vrot.lane.b32.xlu0 %v462, 32
    %v488 = vpop.permute.xlu0 %487
    %489 = vrot.lane.b32.xlu0 %v466, 32
    %v490 = vpop.permute.xlu0 %489
    %491 = vrot.lane.b32.xlu0 %v465, 32
    %v492 = vpop.permute.xlu0 %491
    %493 = vrot.lane.b32.xlu0 %v469, 32
    %v494 = vpop.permute.xlu0 %493
    %495 = vrot.lane.b32.xlu0 %v468, 32
    %v496 = vpop.permute.xlu0 %495
    %497 = vrot.lane.b32.xlu0 %v472, 32
    %v498 = vpop.permute.xlu0 %497
    %499 = vrot.lane.b32.xlu0 %v471, 32
    %v500 = vpop.permute.xlu0 %499
    %501 = vrot.lane.b32.xlu0 %v475, 32
    %v502 = vpop.permute.xlu0 %501
    %503 = vrot.lane.b32.xlu0 %v474, 32
    %v504 = vpop.permute.xlu0 %503
    %505 = vrot.lane.b32.xlu0 %v478, 32
    %v506 = vpop.permute.xlu0 %505
    %507 = vrot.lane.b32.xlu0 %v477, 32
    %v508 = vpop.permute.xlu0 %507
    %509 = vrot.lane.b32.xlu0 %v481, 32
    %v510 = vpop.permute.xlu0 %509
    %511 = vrot.lane.b32.xlu0 %v480, 32
    %v512 = vpop.permute.xlu0 %511
    %513 = vrot.lane.b32.xlu0 %v484, 32
    %v514 = vpop.permute.xlu0 %513
    %515 = vrot.lane.b32.xlu0 %v483, 32
    %v516 = vpop.permute.xlu0 %515
    %vm533 = vcmask 130048
    %v534 = vsel %vm533, %v357, %v414
    %v535 = vsel %vm533, %v358, %v416
    %v536 = vsel %vm533, %v359, %v418
    %v537 = vsel %vm533, %v360, %v420
    %v538 = vsel %vm533, %v361, %v422
    %v539 = vsel %vm533, %v362, %v424
    %v540 = vsel %vm533, %v363, %v426
    %v541 = vsel %vm533, %v364, %v428
    %v542 = vsel %vm533, %v365, %v430
    %v543 = vsel %vm533, %v366, %v432
    %v544 = vsel %vm533, %v367, %v434
    %v545 = vsel %vm533, %v368, %v436
    %v546 = vsel %vm533, %v369, %v438
    %v547 = vsel %vm533, %v370, %v440
    %v548 = vsel %vm533, %v371, %v442
    %v549 = vsel %vm533, %v372, %v444
    %vm550 = vcmask 261120
    %v551 = vsel %vm550, %v534, %v486
    %v552 = vsel %vm550, %v535, %v488
    %v553 = vsel %vm550, %v536, %v490
    %v554 = vsel %vm550, %v537, %v492
    %v555 = vsel %vm550, %v538, %v494
    %v556 = vsel %vm550, %v539, %v496
    %v557 = vsel %vm550, %v540, %v498
    %v558 = vsel %vm550, %v541, %v500
    %v559 = vsel %vm550, %v542, %v502
    %v560 = vsel %vm550, %v543, %v504
    %v561 = vsel %vm550, %v544, %v506
    %v562 = vsel %vm550, %v545, %v508
    %v563 = vsel %vm550, %v546, %v510
    %v564 = vsel %vm550, %v547, %v512
    %v565 = vsel %vm550, %v548, %v514
    %v566 = vsel %vm550, %v549, %v516
    %v583 = vcombine.high %v551, %v551
    %v584 = vcombine.high %v553, %v553
    %v585 = vcombine.high %v555, %v555
    %v586 = vcombine.high %v557, %v557
    %v587 = vcombine.high %v559, %v559
    %v588 = vcombine.high %v561, %v561
    %v589 = vcombine.high %v563, %v563
    %v590 = vcombine.high %v565, %v565
    %v591 = vlaneseq
    %v592 = vshrl.u32 %v591, 7
    %v593 = vsub.s32 1, %v592
    %v594 = vrot.slane %v31, %v593
    %v595 = vcombine.low %v551, %v583
    %v596 = vcombine.low %v552, %v553
    %v597 = vcombine.low %v584, %v554
    %v598 = vcombine.low %v555, %v585
    %v599 = vcombine.low %v556, %v557
    %v600 = vcombine.low %v586, %v558
    %v601 = vcombine.low %v559, %v587
    %v602 = vcombine.low %v560, %v561
    %v603 = vcombine.low %v588, %v562
    %v604 = vcombine.low %v563, %v589
    %v605 = vcombine.low %v564, %v565
    %v606 = vcombine.low %v590, %v566
    %vm607 = vcmask 392192
    %v608 = vsel %vm607, %v595, 0
    %v610 = vsel %vm607, %v596, 0
    %v612 = vsel %vm607, %v597, 0
    %v614 = vsel %vm607, %v598, 0
    %v616 = vsel %vm607, %v599, 0
    %v618 = vsel %vm607, %v600, 0
    %v620 = vsel %vm607, %v601, 0
    %v622 = vsel %vm607, %v602, 0
    %v624 = vsel %vm607, %v603, 0
    %v626 = vsel %vm607, %v604, 0
    %v628 = vsel %vm607, %v605, 0
    %v630 = vsel %vm607, %v606, 0
    %632 = vmatprep.subr.mxu0 0.0
    %633 = vmatpush1.msra.mxu0 %v33
    %634 = vmatprep.subr.mxu0 0.0
    %635 = vmatpush1.msra.mxu0 %v34
    %636 = vmatprep.subr.mxu0 0.0
    %637 = vmatpush1.msra.mxu0 %v35
    %638 = vmatprep.subr.mxu0 0.0
    %639 = vmatpush1.msra.mxu0 %v36
    %640 = vmatprep.subr.mxu0 0.0
    %641 = vmatpush1.msra.mxu0 %v37
    %642 = vmatprep.subr.mxu0 0.0
    %643 = vmatpush1.msra.mxu0 %v38
    %644 = vmatprep.subr.mxu0 0.0
    %645 = vmatpush1.msra.mxu0 0.0
    %646 = vmatprep.subr.mxu0 0.0
    %647 = vmatpush1.msra.mxu0 0.0
    %648 = vmatprep.subr.mxu0 0.0
    %649 = vmatpush1.msra.mxu0 0.0
    %650 = vmatprep.subr.mxu0 0.0
    %651 = vmatpush1.msra.mxu0 0.0
    %652 = vmatprep.subr.mxu0 0.0
    %653 = vmatpush1.msra.mxu0 0.0
    %654 = vmatprep.subr.mxu0 0.0
    %655 = vmatpush1.msra.mxu0 0.0
    %656 = vmatprep.subr.mxu0 0.0
    %657 = vmatpush1.msra.mxu0 0.0
    %658 = vmatprep.subr.mxu0 0.0
    %659 = vmatpush1.msra.mxu0 0.0
    %660 = vmatprep.subr.mxu0 0.0
    %661 = vmatpush1.msra.mxu0 0.0
    %662 = vmatprep.subr.mxu0 0.0
    %663 = vmatpush1.msra.mxu0 0.0
    %664 = vmatprep.subr.mxu0 0.0
    %665 = vmatpush1.msra.mxu0 0.0
    %666 = vmatprep.subr.mxu0 0.0
    %667 = vmatpush1.msra.mxu0 0.0
    %668 = vmatprep.subr.mxu0 0.0
    %669 = vmatpush1.msra.mxu0 0.0
    %670 = vmatprep.subr.mxu0 0.0
    %671 = vmatpush1.msra.mxu0 0.0
    %672 = vmatprep.subr.mxu0 0.0
    %673 = vmatpush1.msra.mxu0 0.0
    %674 = vmatprep.subr.mxu0 0.0
    %675 = vmatpush1.msra.mxu0 0.0
    %676 = vmatprep.subr.mxu0 0.0
    %677 = vmatpush1.msra.mxu0 0.0
    %678 = vmatprep.subr.mxu0 0.0
    %679 = vmatpush1.msra.mxu0 0.0
    %680 = vmatprep.subr.mxu0 0.0
    %681 = vmatpush1.msra.mxu0 0.0
    %682 = vmatprep.subr.mxu0 0.0
    %683 = vmatpush1.msra.mxu0 0.0
    %684 = vmatprep.subr.mxu0 0.0
    %685 = vmatpush1.msra.mxu0 0.0
    %686 = vmatprep.subr.mxu0 0.0
    %687 = vmatpush1.msra.mxu0 0.0
    %688 = vmatprep.subr.mxu0 0.0
    %689 = vmatpush1.msra.mxu0 0.0
    %690 = vmatprep.subr.mxu0 0.0
    %691 = vmatpush1.msra.mxu0 0.0
    %692 = vmatprep.subr.mxu0 0.0
    %693 = vmatpush1.msra.mxu0 0.0
    %694 = vmatprep.subr.mxu0 0.0
    %695 = vmatpush1.msra.mxu0 0.0
    %696 = vmatprep.mubr.f32.mxu0 0.0
    %697 = vmatmul.mubr.f32.gmra.mrb[0].mxu0 %v608
    %v698 = vpop.f32.mrb[0].mxu0
    %v699 = vadd.f32 %v594, %v698
    %v700 = vpop.f32.mrb[0].mxu0
    %701 = vmatprep.mubr.f32.mxu0 0.0
    %702 = vmatmul.mubr.f32.gmra.mrb[0].mxu0 %v610
    %v703 = vpop.f32.mrb[0].mxu0
    %v704 = vadd.f32 %v594, %v703
    %v705 = vpop.f32.mrb[0].mxu0
    %706 = vmatprep.mubr.f32.mxu0 0.0
    %707 = vmatmul.mubr.f32.gmra.mrb[0].mxu0 %v612
    %v708 = vpop.f32.mrb[0].mxu0
    %v709 = vadd.f32 %v594, %v708
    %v710 = vpop.f32.mrb[0].mxu0
    %711 = vmatprep.mubr.f32.mxu0 0.0
    %712 = vmatmul.mubr.f32.gmra.mrb[0].mxu0 %v614
    %v713 = vpop.f32.mrb[0].mxu0
    %v714 = vadd.f32 %v594, %v713
    %v715 = vpop.f32.mrb[0].mxu0
    %716 = vmatprep.mubr.f32.mxu0 0.0
    %717 = vmatmul.mubr.f32.gmra.mrb[0].mxu0 %v616
    %v718 = vpop.f32.mrb[0].mxu0
    %v719 = vadd.f32 %v594, %v718
    %v720 = vpop.f32.mrb[0].mxu0
    %721 = vmatprep.mubr.f32.mxu0 0.0
    %722 = vmatmul.mubr.f32.gmra.mrb[0].mxu0 %v618
    %v723 = vpop.f32.mrb[0].mxu0
    %v724 = vadd.f32 %v594, %v723
    %v725 = vpop.f32.mrb[0].mxu0
    %726 = vmatprep.mubr.f32.mxu0 0.0
    %727 = vmatmul.mubr.f32.gmra.mrb[0].mxu0 %v620
    %v728 = vpop.f32.mrb[0].mxu0
    %v729 = vadd.f32 %v594, %v728
    %v730 = vpop.f32.mrb[0].mxu0
    %731 = vmatprep.mubr.f32.mxu0 0.0
    %732 = vmatmul.mubr.f32.gmra.mrb[0].mxu0 %v622
    %v733 = vpop.f32.mrb[0].mxu0
    %v734 = vadd.f32 %v594, %v733
    %v735 = vpop.f32.mrb[0].mxu0
    %736 = vmatprep.mubr.f32.mxu0 0.0
    %737 = vmatmul.mubr.f32.gmra.mrb[0].mxu0 %v624
    %v738 = vpop.f32.mrb[0].mxu0
    %v739 = vadd.f32 %v594, %v738
    %v740 = vpop.f32.mrb[0].mxu0
    %741 = vmatprep.mubr.f32.mxu0 0.0
    %742 = vmatmul.mubr.f32.gmra.mrb[0].mxu0 %v626
    %v743 = vpop.f32.mrb[0].mxu0
    %v744 = vadd.f32 %v594, %v743
    %v745 = vpop.f32.mrb[0].mxu0
    %746 = vmatprep.mubr.f32.mxu0 0.0
    %747 = vmatmul.mubr.f32.gmra.mrb[0].mxu0 %v628
    %v748 = vpop.f32.mrb[0].mxu0
    %v749 = vadd.f32 %v594, %v748
    %v750 = vpop.f32.mrb[0].mxu0
    %751 = vmatprep.mubr.f32.mxu0 0.0
    %752 = vmatmul.mubr.f32.gmra.mrb[0].mxu0 %v630
    %v753 = vpop.f32.mrb[0].mxu0
    %v754 = vadd.f32 %v594, %v753
    %v755 = vpop.f32.mrb[0].mxu0
    %756 = vdwg.mxu0
    %v757 = vmax.f32 %v699, 0.0
    %v758 = vmax.f32 %v704, 0.0
    %v759 = vmax.f32 %v709, 0.0
    %v760 = vmax.f32 %v714, 0.0
    %v761 = vmax.f32 %v719, 0.0
    %v762 = vmax.f32 %v724, 0.0
    %v763 = vmax.f32 %v729, 0.0
    %v764 = vmax.f32 %v734, 0.0
    %v765 = vmax.f32 %v739, 0.0
    %v766 = vmax.f32 %v744, 0.0
    %v767 = vmax.f32 %v749, 0.0
    %v768 = vmax.f32 %v754, 0.0
    %v781 = vcombine.high %v757, %v757
    %v782 = vcombine.high %v758, %v758
    %v783 = vcombine.high %v759, %v759
    %v784 = vcombine.high %v760, %v760
    %v785 = vcombine.high %v761, %v761
    %v786 = vcombine.high %v762, %v762
    %v787 = vcombine.high %v763, %v763
    %v788 = vcombine.high %v764, %v764
    %v789 = vcombine.high %v765, %v765
    %v790 = vcombine.high %v766, %v766
    %v791 = vcombine.high %v767, %v767
    %v792 = vcombine.high %v768, %v768
    %v797 = vcombine.low %v757, %v781
    %v798 = vcombine.low %v782, %v759
    %v799 = vcombine.low %v760, %v784
    %v800 = vcombine.low %v785, %v762
    %v801 = vcombine.low %v763, %v787
    %v802 = vcombine.low %v788, %v765
    %v803 = vcombine.low %v766, %v790
    %v804 = vcombine.low %v791, %v768
    %v813 = vrot.slane %v797, 1
    %v814 = vrot.slane %v758, 1
    %v815 = vsel %vm207, %v813, %v814
    %v816 = vrot.slane %v798, 1
    %v817 = vrot.slane %v783, 1
    %v818 = vsel %vm207, %v816, %v817
    %v819 = vrot.slane %v799, 1
    %v820 = vrot.slane %v761, 1
    %v821 = vsel %vm207, %v819, %v820
    %v822 = vrot.slane %v800, 1
    %v823 = vrot.slane %v786, 1
    %v824 = vsel %vm207, %v822, %v823
    %v825 = vrot.slane %v801, 1
    %v826 = vrot.slane %v764, 1
    %v827 = vsel %vm207, %v825, %v826
    %v828 = vrot.slane %v802, 1
    %v829 = vrot.slane %v789, 1
    %v830 = vsel %vm207, %v828, %v829
    %v831 = vrot.slane %v803, 1
    %v832 = vrot.slane %v767, 1
    %v833 = vsel %vm207, %v831, %v832
    %v834 = vrot.slane %v804, 1
    %v835 = vrot.slane %v792, 1
    %v836 = vsel %vm207, %v834, %v835
    %837 = vrot.lane.b32.xlu0 %v815, 16
    %v838 = vpop.permute.xlu0 %837
    %839 = vrot.lane.b32.xlu0 %v814, 16
    %v840 = vpop.permute.xlu0 %839
    %841 = vrot.lane.b32.xlu0 %v818, 16
    %v842 = vpop.permute.xlu0 %841
    %843 = vrot.lane.b32.xlu0 %v817, 16
    %v844 = vpop.permute.xlu0 %843
    %845 = vrot.lane.b32.xlu0 %v821, 16
    %v846 = vpop.permute.xlu0 %845
    %847 = vrot.lane.b32.xlu0 %v820, 16
    %v848 = vpop.permute.xlu0 %847
    %849 = vrot.lane.b32.xlu0 %v824, 16
    %v850 = vpop.permute.xlu0 %849
    %851 = vrot.lane.b32.xlu0 %v823, 16
    %v852 = vpop.permute.xlu0 %851
    %853 = vrot.lane.b32.xlu0 %v827, 16
    %v854 = vpop.permute.xlu0 %853
    %855 = vrot.lane.b32.xlu0 %v826, 16
    %v856 = vpop.permute.xlu0 %855
    %857 = vrot.lane.b32.xlu0 %v830, 16
    %v858 = vpop.permute.xlu0 %857
    %859 = vrot.lane.b32.xlu0 %v829, 16
    %v860 = vpop.permute.xlu0 %859
    %861 = vrot.lane.b32.xlu0 %v833, 16
    %v862 = vpop.permute.xlu0 %861
    %863 = vrot.lane.b32.xlu0 %v832, 16
    %v864 = vpop.permute.xlu0 %863
    %865 = vrot.lane.b32.xlu0 %v836, 16
    %v866 = vpop.permute.xlu0 %865
    %867 = vrot.lane.b32.xlu0 %v835, 16
    %v868 = vpop.permute.xlu0 %867
    %v885 = vrot.slane %v797, 2
    %v886 = vrot.slane %v758, 2
    %v887 = vsel %vm300, %v885, %v886
    %v888 = vrot.slane %v798, 2
    %v889 = vrot.slane %v783, 2
    %v890 = vsel %vm300, %v888, %v889
    %v891 = vrot.slane %v799, 2
    %v892 = vrot.slane %v761, 2
    %v893 = vsel %vm300, %v891, %v892
    %v894 = vrot.slane %v800, 2
    %v895 = vrot.slane %v786, 2
    %v896 = vsel %vm300, %v894, %v895
    %v897 = vrot.slane %v801, 2
    %v898 = vrot.slane %v764, 2
    %v899 = vsel %vm300, %v897, %v898
    %v900 = vrot.slane %v802, 2
    %v901 = vrot.slane %v789, 2
    %v902 = vsel %vm300, %v900, %v901
    %v903 = vrot.slane %v803, 2
    %v904 = vrot.slane %v767, 2
    %v905 = vsel %vm300, %v903, %v904
    %v906 = vrot.slane %v804, 2
    %v907 = vrot.slane %v792, 2
    %v908 = vsel %vm300, %v906, %v907
    %909 = vrot.lane.b32.xlu0 %v887, 32
    %v910 = vpop.permute.xlu0 %909
    %911 = vrot.lane.b32.xlu0 %v886, 32
    %v912 = vpop.permute.xlu0 %911
    %913 = vrot.lane.b32.xlu0 %v890, 32
    %v914 = vpop.permute.xlu0 %913
    %915 = vrot.lane.b32.xlu0 %v889, 32
    %v916 = vpop.permute.xlu0 %915
    %917 = vrot.lane.b32.xlu0 %v893, 32
    %v918 = vpop.permute.xlu0 %917
    %919 = vrot.lane.b32.xlu0 %v892, 32
    %v920 = vpop.permute.xlu0 %919
    %921 = vrot.lane.b32.xlu0 %v896, 32
    %v922 = vpop.permute.xlu0 %921
    %923 = vrot.lane.b32.xlu0 %v895, 32
    %v924 = vpop.permute.xlu0 %923
    %925 = vrot.lane.b32.xlu0 %v899, 32
    %v926 = vpop.permute.xlu0 %925
    %927 = vrot.lane.b32.xlu0 %v898, 32
    %v928 = vpop.permute.xlu0 %927
    %929 = vrot.lane.b32.xlu0 %v902, 32
    %v930 = vpop.permute.xlu0 %929
    %931 = vrot.lane.b32.xlu0 %v901, 32
    %v932 = vpop.permute.xlu0 %931
    %933 = vrot.lane.b32.xlu0 %v905, 32
    %v934 = vpop.permute.xlu0 %933
    %935 = vrot.lane.b32.xlu0 %v904, 32
    %v936 = vpop.permute.xlu0 %935
    %937 = vrot.lane.b32.xlu0 %v908, 32
    %v938 = vpop.permute.xlu0 %937
    %939 = vrot.lane.b32.xlu0 %v907, 32
    %v940 = vpop.permute.xlu0 %939
    %v957 = vsel %vm533, %v797, %v838
    %v958 = vsel %vm533, %v758, %v840
    %v959 = vsel %vm533, %v798, %v842
    %v960 = vsel %vm533, %v783, %v844
    %v961 = vsel %vm533, %v799, %v846
    %v962 = vsel %vm533, %v761, %v848
    %v963 = vsel %vm533, %v800, %v850
    %v964 = vsel %vm533, %v786, %v852
    %v965 = vsel %vm533, %v801, %v854
    %v966 = vsel %vm533, %v764, %v856
    %v967 = vsel %vm533, %v802, %v858
    %v968 = vsel %vm533, %v789, %v860
    %v969 = vsel %vm533, %v803, %v862
    %v970 = vsel %vm533, %v767, %v864
    %v971 = vsel %vm533, %v804, %v866
    %v972 = vsel %vm533, %v792, %v868
    %v973 = vsel %vm550, %v957, %v910
    %v974 = vsel %vm550, %v958, %v912
    %v975 = vsel %vm550, %v959, %v914
    %v976 = vsel %vm550, %v960, %v916
    %v977 = vsel %vm550, %v961, %v918
    %v978 = vsel %vm550, %v962, %v920
    %v979 = vsel %vm550, %v963, %v922
    %v980 = vsel %vm550, %v964, %v924
    %v981 = vsel %vm550, %v965, %v926
    %v982 = vsel %vm550, %v966, %v928
    %v983 = vsel %vm550, %v967, %v930
    %v984 = vsel %vm550, %v968, %v932
    %v985 = vsel %vm550, %v969, %v934
    %v986 = vsel %vm550, %v970, %v936
    %v987 = vsel %vm550, %v971, %v938
    %v988 = vsel %vm550, %v972, %v940
    %v1005 = vcombine.high %v973, %v973
    %v1007 = vunpack.c.l.s4 1983009808
    %v1008 = vunpack.c.0.s8 %v1007
    %v1009 = vlaneseq
    %v1010 = vshrl.u32 %v1009, 7
    %v1011 = vsub.s32 %v1008, %v1010
    %v1012 = vrot.slane %v973, %v1011
    %v1014 = vunpack.c.l.s4 1983009808
    %v1015 = vunpack.c.0.s8 %v1014
    %v1016 = vlaneseq
    %v1017 = vshrl.u32 %v1016, 7
    %v1018 = vsub.s32 %v1015, %v1017
    %v1019 = vrot.slane %v1005, %v1018
    %v1020 = vcombine.high %v1012, %v1012
    %v1021 = vcombine.high %v1019, %v1019
    %v1023 = vunpack.c.l.s4 1983009808
    %v1024 = vunpack.c.0.s8 %v1023
    %v1025 = vlaneseq
    %v1026 = vshrl.u32 %v1025, 7
    %v1027 = vsub.s32 %v1024, %v1026
    %v1028 = vrot.slane %v974, %v1027
    %v1029 = vcombine.high %v975, %v975
    %v1031 = vunpack.c.l.s4 1983009808
    %v1032 = vunpack.c.0.s8 %v1031
    %v1033 = vlaneseq
    %v1034 = vshrl.u32 %v1033, 7
    %v1035 = vsub.s32 %v1032, %v1034
    %v1036 = vrot.slane %v975, %v1035
    %v1038 = vunpack.c.l.s4 1983009808
    %v1039 = vunpack.c.0.s8 %v1038
    %v1040 = vlaneseq
    %v1041 = vshrl.u32 %v1040, 7
    %v1042 = vsub.s32 %v1039, %v1041
    %v1043 = vrot.slane %v1029, %v1042
    %v1044 = vcombine.high %v1036, %v1036
    %v1045 = vcombine.high %v1043, %v1043
    %v1047 = vunpack.c.l.s4 1983009808
    %v1048 = vunpack.c.0.s8 %v1047
    %v1049 = vlaneseq
    %v1050 = vshrl.u32 %v1049, 7
    %v1051 = vsub.s32 %v1048, %v1050
    %v1052 = vrot.slane %v976, %v1051
    %v1053 = vcombine.high %v977, %v977
    %v1055 = vunpack.c.l.s4 1983009808
    %v1056 = vunpack.c.0.s8 %v1055
    %v1057 = vlaneseq
    %v1058 = vshrl.u32 %v1057, 7
    %v1059 = vsub.s32 %v1056, %v1058
    %v1060 = vrot.slane %v977, %v1059
    %v1062 = vunpack.c.l.s4 1983009808
    %v1063 = vunpack.c.0.s8 %v1062
    %v1064 = vlaneseq
    %v1065 = vshrl.u32 %v1064, 7
    %v1066 = vsub.s32 %v1063, %v1065
    %v1067 = vrot.slane %v1053, %v1066
    %v1068 = vcombine.high %v1060, %v1060
    %v1069 = vcombine.high %v1067, %v1067
    %v1071 = vunpack.c.l.s4 1983009808
    %v1072 = vunpack.c.0.s8 %v1071
    %v1073 = vlaneseq
    %v1074 = vshrl.u32 %v1073, 7
    %v1075 = vsub.s32 %v1072, %v1074
    %v1076 = vrot.slane %v978, %v1075
    %v1077 = vcombine.high %v979, %v979
    %v1079 = vunpack.c.l.s4 1983009808
    %v1080 = vunpack.c.0.s8 %v1079
    %v1081 = vlaneseq
    %v1082 = vshrl.u32 %v1081, 7
    %v1083 = vsub.s32 %v1080, %v1082
    %v1084 = vrot.slane %v979, %v1083
    %v1086 = vunpack.c.l.s4 1983009808
    %v1087 = vunpack.c.0.s8 %v1086
    %v1088 = vlaneseq
    %v1089 = vshrl.u32 %v1088, 7
    %v1090 = vsub.s32 %v1087, %v1089
    %v1091 = vrot.slane %v1077, %v1090
    %v1092 = vcombine.high %v1084, %v1084
    %v1093 = vcombine.high %v1091, %v1091
    %v1095 = vunpack.c.l.s4 1983009808
    %v1096 = vunpack.c.0.s8 %v1095
    %v1097 = vlaneseq
    %v1098 = vshrl.u32 %v1097, 7
    %v1099 = vsub.s32 %v1096, %v1098
    %v1100 = vrot.slane %v980, %v1099
    %v1101 = vcombine.high %v981, %v981
    %v1103 = vunpack.c.l.s4 1983009808
    %v1104 = vunpack.c.0.s8 %v1103
    %v1105 = vlaneseq
    %v1106 = vshrl.u32 %v1105, 7
    %v1107 = vsub.s32 %v1104, %v1106
    %v1108 = vrot.slane %v981, %v1107
    %v1110 = vunpack.c.l.s4 1983009808
    %v1111 = vunpack.c.0.s8 %v1110
    %v1112 = vlaneseq
    %v1113 = vshrl.u32 %v1112, 7
    %v1114 = vsub.s32 %v1111, %v1113
    %v1115 = vrot.slane %v1101, %v1114
    %v1116 = vcombine.high %v1108, %v1108
    %v1117 = vcombine.high %v1115, %v1115
    %v1119 = vunpack.c.l.s4 1983009808
    %v1120 = vunpack.c.0.s8 %v1119
    %v1121 = vlaneseq
    %v1122 = vshrl.u32 %v1121, 7
    %v1123 = vsub.s32 %v1120, %v1122
    %v1124 = vrot.slane %v982, %v1123
    %v1125 = vcombine.high %v983, %v983
    %v1127 = vunpack.c.l.s4 1983009808
    %v1128 = vunpack.c.0.s8 %v1127
    %v1129 = vlaneseq
    %v1130 = vshrl.u32 %v1129, 7
    %v1131 = vsub.s32 %v1128, %v1130
    %v1132 = vrot.slane %v983, %v1131
    %v1134 = vunpack.c.l.s4 1983009808
    %v1135 = vunpack.c.0.s8 %v1134
    %v1136 = vlaneseq
    %v1137 = vshrl.u32 %v1136, 7
    %v1138 = vsub.s32 %v1135, %v1137
    %v1139 = vrot.slane %v1125, %v1138
    %v1140 = vcombine.high %v1132, %v1132
    %v1141 = vcombine.high %v1139, %v1139
    %v1143 = vunpack.c.l.s4 1983009808
    %v1144 = vunpack.c.0.s8 %v1143
    %v1145 = vlaneseq
    %v1146 = vshrl.u32 %v1145, 7
    %v1147 = vsub.s32 %v1144, %v1146
    %v1148 = vrot.slane %v984, %v1147
    %v1149 = vcombine.high %v985, %v985
    %v1151 = vunpack.c.l.s4 1983009808
    %v1152 = vunpack.c.0.s8 %v1151
    %v1153 = vlaneseq
    %v1154 = vshrl.u32 %v1153, 7
    %v1155 = vsub.s32 %v1152, %v1154
    %v1156 = vrot.slane %v985, %v1155
    %v1158 = vunpack.c.l.s4 1983009808
    %v1159 = vunpack.c.0.s8 %v1158
    %v1160 = vlaneseq
    %v1161 = vshrl.u32 %v1160, 7
    %v1162 = vsub.s32 %v1159, %v1161
    %v1163 = vrot.slane %v1149, %v1162
    %v1164 = vcombine.high %v1156, %v1156
    %v1165 = vcombine.high %v1163, %v1163
    %v1167 = vunpack.c.l.s4 1983009808
    %v1168 = vunpack.c.0.s8 %v1167
    %v1169 = vlaneseq
    %v1170 = vshrl.u32 %v1169, 7
    %v1171 = vsub.s32 %v1168, %v1170
    %v1172 = vrot.slane %v986, %v1171
    %v1173 = vcombine.high %v987, %v987
    %v1175 = vunpack.c.l.s4 1983009808
    %v1176 = vunpack.c.0.s8 %v1175
    %v1177 = vlaneseq
    %v1178 = vshrl.u32 %v1177, 7
    %v1179 = vsub.s32 %v1176, %v1178
    %v1180 = vrot.slane %v987, %v1179
    %v1182 = vunpack.c.l.s4 1983009808
    %v1183 = vunpack.c.0.s8 %v1182
    %v1184 = vlaneseq
    %v1185 = vshrl.u32 %v1184, 7
    %v1186 = vsub.s32 %v1183, %v1185
    %v1187 = vrot.slane %v1173, %v1186
    %v1188 = vcombine.high %v1180, %v1180
    %v1189 = vcombine.high %v1187, %v1187
    %v1191 = vunpack.c.l.s4 1983009808
    %v1192 = vunpack.c.0.s8 %v1191
    %v1193 = vlaneseq
    %v1194 = vshrl.u32 %v1193, 7
    %v1195 = vsub.s32 %v1192, %v1194
    %v1196 = vrot.slane %v988, %v1195
    %v1197 = vlaneseq
    %v1198 = vshrl.u32 %v1197, 7
    %v1199 = vsub.s32 2, %v1198
    %v1200 = vrot.slane %v31, %v1199
    %v1201 = vcombine.low %v1012, %v1020
    %v1202 = vcombine.low %v1019, %v1021
    %v1204 = vunpack.c.l.s4 1983009808
    %v1205 = vunpack.c.0.s8 %v1204
    %v1206 = vlaneseq
    %v1207 = vshrl.u32 %v1206, 7
    %v1208 = vsub.s32 %v1205, %v1207
    %v1209 = vrot.slane %v1201, %v1208
    %v1211 = vunpack.c.l.s4 1983009808
    %v1212 = vunpack.c.0.s8 %v1211
    %v1213 = vlaneseq
    %v1214 = vshrl.u32 %v1213, 7
    %v1215 = vsub.s32 %v1212, %v1214
    %v1216 = vrot.slane %v1202, %v1215
    %v1217 = vcombine.low %v1209, %v1216
    %v1218 = vcombine.low %v1028, %v1036
    %v1219 = vcombine.low %v1044, %v1043
    %v1221 = vunpack.c.l.s4 1983009808
    %v1222 = vunpack.c.0.s8 %v1221
    %v1223 = vlaneseq
    %v1224 = vshrl.u32 %v1223, 7
    %v1225 = vsub.s32 %v1222, %v1224
    %v1226 = vrot.slane %v1218, %v1225
    %v1228 = vunpack.c.l.s4 1983009808
    %v1229 = vunpack.c.0.s8 %v1228
    %v1230 = vlaneseq
    %v1231 = vshrl.u32 %v1230, 7
    %v1232 = vsub.s32 %v1229, %v1231
    %v1233 = vrot.slane %v1219, %v1232
    %v1234 = vcombine.low %v1226, %v1233
    %v1235 = vcombine.low %v1045, %v1052
    %v1236 = vcombine.low %v1060, %v1068
    %v1238 = vunpack.c.l.s4 1983009808
    %v1239 = vunpack.c.0.s8 %v1238
    %v1240 = vlaneseq
    %v1241 = vshrl.u32 %v1240, 7
    %v1242 = vsub.s32 %v1239, %v1241
    %v1243 = vrot.slane %v1235, %v1242
    %v1245 = vunpack.c.l.s4 1983009808
    %v1246 = vunpack.c.0.s8 %v1245
    %v1247 = vlaneseq
    %v1248 = vshrl.u32 %v1247, 7
    %v1249 = vsub.s32 %v1246, %v1248
    %v1250 = vrot.slane %v1236, %v1249
    %v1251 = vcombine.low %v1243, %v1250
    %v1252 = vcombine.low %v1067, %v1069
    %v1253 = vcombine.low %v1076, %v1084
    %v1255 = vunpack.c.l.s4 1983009808
    %v1256 = vunpack.c.0.s8 %v1255
    %v1257 = vlaneseq
    %v1258 = vshrl.u32 %v1257, 7
    %v1259 = vsub.s32 %v1256, %v1258
    %v1260 = vrot.slane %v1252, %v1259
    %v1262 = vunpack.c.l.s4 1983009808
    %v1263 = vunpack.c.0.s8 %v1262
    %v1264 = vlaneseq
    %v1265 = vshrl.u32 %v1264, 7
    %v1266 = vsub.s32 %v1263, %v1265
    %v1267 = vrot.slane %v1253, %v1266
    %v1268 = vcombine.low %v1260, %v1267
    %v1269 = vcombine.low %v1092, %v1091
    %v1270 = vcombine.low %v1093, %v1100
    %v1272 = vunpack.c.l.s4 1983009808
    %v1273 = vunpack.c.0.s8 %v1272
    %v1274 = vlaneseq
    %v1275 = vshrl.u32 %v1274, 7
    %v1276 = vsub.s32 %v1273, %v1275
    %v1277 = vrot.slane %v1269, %v1276
    %v1279 = vunpack.c.l.s4 1983009808
    %v1280 = vunpack.c.0.s8 %v1279
    %v1281 = vlaneseq
    %v1282 = vshrl.u32 %v1281, 7
    %v1283 = vsub.s32 %v1280, %v1282
    %v1284 = vrot.slane %v1270, %v1283
    %v1285 = vcombine.low %v1277, %v1284
    %v1286 = vcombine.low %v1108, %v1116
    %v1287 = vcombine.low %v1115, %v1117
    %v1289 = vunpack.c.l.s4 1983009808
    %v1290 = vunpack.c.0.s8 %v1289
    %v1291 = vlaneseq
    %v1292 = vshrl.u32 %v1291, 7
    %v1293 = vsub.s32 %v1290, %v1292
    %v1294 = vrot.slane %v1286, %v1293
    %v1296 = vunpack.c.l.s4 1983009808
    %v1297 = vunpack.c.0.s8 %v1296
    %v1298 = vlaneseq
    %v1299 = vshrl.u32 %v1298, 7
    %v1300 = vsub.s32 %v1297, %v1299
    %v1301 = vrot.slane %v1287, %v1300
    %v1302 = vcombine.low %v1294, %v1301
    %v1303 = vcombine.low %v1124, %v1132
    %v1304 = vcombine.low %v1140, %v1139
    %v1306 = vunpack.c.l.s4 1983009808
    %v1307 = vunpack.c.0.s8 %v1306
    %v1308 = vlaneseq
    %v1309 = vshrl.u32 %v1308, 7
    %v1310 = vsub.s32 %v1307, %v1309
    %v1311 = vrot.slane %v1303, %v1310
    %v1313 = vunpack.c.l.s4 1983009808
    %v1314 = vunpack.c.0.s8 %v1313
    %v1315 = vlaneseq
    %v1316 = vshrl.u32 %v1315, 7
    %v1317 = vsub.s32 %v1314, %v1316
    %v1318 = vrot.slane %v1304, %v1317
    %v1319 = vcombine.low %v1311, %v1318
    %v1320 = vcombine.low %v1141, %v1148
    %v1321 = vcombine.low %v1156, %v1164
    %v1323 = vunpack.c.l.s4 1983009808
    %v1324 = vunpack.c.0.s8 %v1323
    %v1325 = vlaneseq
    %v1326 = vshrl.u32 %v1325, 7
    %v1327 = vsub.s32 %v1324, %v1326
    %v1328 = vrot.slane %v1320, %v1327
    %v1330 = vunpack.c.l.s4 1983009808
    %v1331 = vunpack.c.0.s8 %v1330
    %v1332 = vlaneseq
    %v1333 = vshrl.u32 %v1332, 7
    %v1334 = vsub.s32 %v1331, %v1333
    %v1335 = vrot.slane %v1321, %v1334
    %v1336 = vcombine.low %v1328, %v1335
    %v1337 = vcombine.low %v1163, %v1165
    %v1338 = vcombine.low %v1172, %v1180
    %v1340 = vunpack.c.l.s4 1983009808
    %v1341 = vunpack.c.0.s8 %v1340
    %v1342 = vlaneseq
    %v1343 = vshrl.u32 %v1342, 7
    %v1344 = vsub.s32 %v1341, %v1343
    %v1345 = vrot.slane %v1337, %v1344
    %v1347 = vunpack.c.l.s4 1983009808
    %v1348 = vunpack.c.0.s8 %v1347
    %v1349 = vlaneseq
    %v1350 = vshrl.u32 %v1349, 7
    %v1351 = vsub.s32 %v1348, %v1350
    %v1352 = vrot.slane %v1338, %v1351
    %v1353 = vcombine.low %v1345, %v1352
    %v1354 = vcombine.low %v1188, %v1187
    %v1355 = vcombine.low %v1189, %v1196
    %v1357 = vunpack.c.l.s4 1983009808
    %v1358 = vunpack.c.0.s8 %v1357
    %v1359 = vlaneseq
    %v1360 = vshrl.u32 %v1359, 7
    %v1361 = vsub.s32 %v1358, %v1360
    %v1362 = vrot.slane %v1354, %v1361
    %v1364 = vunpack.c.l.s4 1983009808
    %v1365 = vunpack.c.0.s8 %v1364
    %v1366 = vlaneseq
    %v1367 = vshrl.u32 %v1366, 7
    %v1368 = vsub.s32 %v1365, %v1367
    %v1369 = vrot.slane %v1355, %v1368
    %v1370 = vcombine.low %v1362, %v1369
    %v1371 = vsel %vm607, %v1217, 0
    %v1373 = vsel %vm607, %v1234, 0
    %v1375 = vsel %vm607, %v1251, 0
    %v1377 = vsel %vm607, %v1268, 0
    %v1379 = vsel %vm607, %v1285, 0
    %v1381 = vsel %vm607, %v1302, 0
    %v1383 = vsel %vm607, %v1319, 0
    %v1385 = vsel %vm607, %v1336, 0
    %v1387 = vsel %vm607, %v1353, 0
    %v1389 = vsel %vm607, %v1370, 0
    %1391 = vmatprep.subr.mxu0 0.0
    %1392 = vmatpush1.msra.mxu0 %v39
    %1393 = vmatprep.subr.mxu0 0.0
    %1394 = vmatpush1.msra.mxu0 %v40
    %1395 = vmatprep.subr.mxu0 0.0
    %1396 = vmatpush1.msra.mxu0 %v41
    %1397 = vmatprep.subr.mxu0 0.0
    %1398 = vmatpush1.msra.mxu0 %v42
    %1399 = vmatprep.subr.mxu0 0.0
    %1400 = vmatpush1.msra.mxu0 %v43
    %1401 = vmatprep.subr.mxu0 0.0
    %1402 = vmatpush1.msra.mxu0 %v44
    %1403 = vmatprep.subr.mxu0 0.0
    %1404 = vmatpush1.msra.mxu0 0.0
    %1405 = vmatprep.subr.mxu0 0.0
    %1406 = vmatpush1.msra.mxu0 0.0
    %1407 = vmatprep.subr.mxu0 0.0
    %1408 = vmatpush1.msra.mxu0 0.0
    %1409 = vmatprep.subr.mxu0 0.0
    %1410 = vmatpush1.msra.mxu0 0.0
    %1411 = vmatprep.subr.mxu0 0.0
    %1412 = vmatpush1.msra.mxu0 0.0
    %1413 = vmatprep.subr.mxu0 0.0
    %1414 = vmatpush1.msra.mxu0 0.0
    %1415 = vmatprep.subr.mxu0 0.0
    %1416 = vmatpush1.msra.mxu0 0.0
    %1417 = vmatprep.subr.mxu0 0.0
    %1418 = vmatpush1.msra.mxu0 0.0
    %1419 = vmatprep.subr.mxu0 0.0
    %1420 = vmatpush1.msra.mxu0 0.0
    %1421 = vmatprep.subr.mxu0 0.0
    %1422 = vmatpush1.msra.mxu0 0.0
    %1423 = vmatprep.subr.mxu0 0.0
    %1424 = vmatpush1.msra.mxu0 0.0
    %1425 = vmatprep.subr.mxu0 0.0
    %1426 = vmatpush1.msra.mxu0 0.0
    %1427 = vmatprep.subr.mxu0 0.0
    %1428 = vmatpush1.msra.mxu0 0.0
    %1429 = vmatprep.subr.mxu0 0.0
    %1430 = vmatpush1.msra.mxu0 0.0
    %1431 = vmatprep.subr.mxu0 0.0
    %1432 = vmatpush1.msra.mxu0 0.0
    %1433 = vmatprep.subr.mxu0 0.0
    %1434 = vmatpush1.msra.mxu0 0.0
    %1435 = vmatprep.subr.mxu0 0.0
    %1436 = vmatpush1.msra.mxu0 0.0
    %1437 = vmatprep.subr.mxu0 0.0
    %1438 = vmatpush1.msra.mxu0 0.0
    %1439 = vmatprep.subr.mxu0 0.0
    %1440 = vmatpush1.msra.mxu0 0.0
    %1441 = vmatprep.subr.mxu0 0.0
    %1442 = vmatpush1.msra.mxu0 0.0
    %1443 = vmatprep.subr.mxu0 0.0
    %1444 = vmatpush1.msra.mxu0 0.0
    %1445 = vmatprep.subr.mxu0 0.0
    %1446 = vmatpush1.msra.mxu0 0.0
    %1447 = vmatprep.subr.mxu0 0.0
    %1448 = vmatpush1.msra.mxu0 0.0
    %1449 = vmatprep.subr.mxu0 0.0
    %1450 = vmatpush1.msra.mxu0 0.0
    %1451 = vmatprep.subr.mxu0 0.0
    %1452 = vmatpush1.msra.mxu0 0.0
    %1453 = vmatprep.subr.mxu0 0.0
    %1454 = vmatpush1.msra.mxu0 0.0
    %1455 = vmatprep.mubr.f32.mxu0 0.0
    %1456 = vmatmul.mubr.f32.gmra.mrb[0].mxu0 %v1371
    %v1457 = vpop.f32.mrb[0].mxu0
    %v1458 = vadd.f32 %v1200, %v1457
    %v1459 = vpop.f32.mrb[0].mxu0
    %1460 = vmatprep.mubr.f32.mxu0 0.0
    %1461 = vmatmul.mubr.f32.gmra.mrb[0].mxu0 %v1373
    %v1462 = vpop.f32.mrb[0].mxu0
    %v1463 = vadd.f32 %v1200, %v1462
    %v1464 = vpop.f32.mrb[0].mxu0
    %1465 = vmatprep.mubr.f32.mxu0 0.0
    %1466 = vmatmul.mubr.f32.gmra.mrb[0].mxu0 %v1375
    %v1467 = vpop.f32.mrb[0].mxu0
    %v1468 = vadd.f32 %v1200, %v1467
    %v1469 = vpop.f32.mrb[0].mxu0
    %1470 = vmatprep.mubr.f32.mxu0 0.0
    %1471 = vmatmul.mubr.f32.gmra.mrb[0].mxu0 %v1377
    %v1472 = vpop.f32.mrb[0].mxu0
    %v1473 = vadd.f32 %v1200, %v1472
    %v1474 = vpop.f32.mrb[0].mxu0
    %1475 = vmatprep.mubr.f32.mxu0 0.0
    %1476 = vmatmul.mubr.f32.gmra.mrb[0].mxu0 %v1379
    %v1477 = vpop.f32.mrb[0].mxu0
    %v1478 = vadd.f32 %v1200, %v1477
    %v1479 = vpop.f32.mrb[0].mxu0
    %1480 = vmatprep.mubr.f32.mxu0 0.0
    %1481 = vmatmul.mubr.f32.gmra.mrb[0].mxu0 %v1381
    %v1482 = vpop.f32.mrb[0].mxu0
    %v1483 = vadd.f32 %v1200, %v1482
    %v1484 = vpop.f32.mrb[0].mxu0
    %1485 = vmatprep.mubr.f32.mxu0 0.0
    %1486 = vmatmul.mubr.f32.gmra.mrb[0].mxu0 %v1383
    %v1487 = vpop.f32.mrb[0].mxu0
    %v1488 = vadd.f32 %v1200, %v1487
    %v1489 = vpop.f32.mrb[0].mxu0
    %1490 = vmatprep.mubr.f32.mxu0 0.0
    %1491 = vmatmul.mubr.f32.gmra.mrb[0].mxu0 %v1385
    %v1492 = vpop.f32.mrb[0].mxu0
    %v1493 = vadd.f32 %v1200, %v1492
    %v1494 = vpop.f32.mrb[0].mxu0
    %1495 = vmatprep.mubr.f32.mxu0 0.0
    %1496 = vmatmul.mubr.f32.gmra.mrb[0].mxu0 %v1387
    %v1497 = vpop.f32.mrb[0].mxu0
    %v1498 = vadd.f32 %v1200, %v1497
    %v1499 = vpop.f32.mrb[0].mxu0
    %1500 = vmatprep.mubr.f32.mxu0 0.0
    %1501 = vmatmul.mubr.f32.gmra.mrb[0].mxu0 %v1389
    %v1502 = vpop.f32.mrb[0].mxu0
    %v1503 = vadd.f32 %v1200, %v1502
    %v1504 = vpop.f32.mrb[0].mxu0
    %1505 = vdwg.mxu0
    %v1506 = vmax.f32 %v1458, 0.0
    %v1507 = vmax.f32 %v1463, 0.0
    %v1508 = vmax.f32 %v1468, 0.0
    %v1509 = vmax.f32 %v1473, 0.0
    %v1510 = vmax.f32 %v1478, 0.0
    %v1511 = vmax.f32 %v1483, 0.0
    %v1512 = vmax.f32 %v1488, 0.0
    %v1513 = vmax.f32 %v1493, 0.0
    %v1514 = vmax.f32 %v1498, 0.0
    %v1515 = vmax.f32 %v1503, 0.0
    %v1526 = vcombine.high %v1506, %v1506
    %v1528 = vunpack.c.l.s4 1983009808
    %v1529 = vunpack.c.0.s8 %v1528
    %v1530 = vlaneseq
    %v1531 = vshrl.u32 %v1530, 7
    %v1532 = vsub.s32 %v1529, %v1531
    %v1533 = vrot.slane %v1506, %v1532
    %v1535 = vunpack.c.l.s4 1983009808
    %v1536 = vunpack.c.0.s8 %v1535
    %v1537 = vlaneseq
    %v1538 = vshrl.u32 %v1537, 7
    %v1539 = vsub.s32 %v1536, %v1538
    %v1540 = vrot.slane %v1526, %v1539
    %v1541 = vcombine.high %v1533, %v1533
    %v1542 = vcombine.high %v1540, %v1540
    %v1543 = vcombine.high %v1507, %v1507
    %v1545 = vunpack.c.l.s4 1983009808
    %v1546 = vunpack.c.0.s8 %v1545
    %v1547 = vlaneseq
    %v1548 = vshrl.u32 %v1547, 7
    %v1549 = vsub.s32 %v1546, %v1548
    %v1550 = vrot.slane %v1507, %v1549
    %v1552 = vunpack.c.l.s4 1983009808
    %v1553 = vunpack.c.0.s8 %v1552
    %v1554 = vlaneseq
    %v1555 = vshrl.u32 %v1554, 7
    %v1556 = vsub.s32 %v1553, %v1555
    %v1557 = vrot.slane %v1543, %v1556
    %v1558 = vcombine.high %v1550, %v1550
    %v1559 = vcombine.high %v1557, %v1557
    %v1560 = vcombine.high %v1508, %v1508
    %v1562 = vunpack.c.l.s4 1983009808
    %v1563 = vunpack.c.0.s8 %v1562
    %v1564 = vlaneseq
    %v1565 = vshrl.u32 %v1564, 7
    %v1566 = vsub.s32 %v1563, %v1565
    %v1567 = vrot.slane %v1508, %v1566
    %v1569 = vunpack.c.l.s4 1983009808
    %v1570 = vunpack.c.0.s8 %v1569
    %v1571 = vlaneseq
    %v1572 = vshrl.u32 %v1571, 7
    %v1573 = vsub.s32 %v1570, %v1572
    %v1574 = vrot.slane %v1560, %v1573
    %v1575 = vcombine.high %v1567, %v1567
    %v1576 = vcombine.high %v1574, %v1574
    %v1577 = vcombine.high %v1509, %v1509
    %v1579 = vunpack.c.l.s4 1983009808
    %v1580 = vunpack.c.0.s8 %v1579
    %v1581 = vlaneseq
    %v1582 = vshrl.u32 %v1581, 7
    %v1583 = vsub.s32 %v1580, %v1582
    %v1584 = vrot.slane %v1509, %v1583
    %v1586 = vunpack.c.l.s4 1983009808
    %v1587 = vunpack.c.0.s8 %v1586
    %v1588 = vlaneseq
    %v1589 = vshrl.u32 %v1588, 7
    %v1590 = vsub.s32 %v1587, %v1589
    %v1591 = vrot.slane %v1577, %v1590
    %v1592 = vcombine.high %v1584, %v1584
    %v1593 = vcombine.high %v1591, %v1591
    %v1594 = vcombine.high %v1510, %v1510
    %v1596 = vunpack.c.l.s4 1983009808
    %v1597 = vunpack.c.0.s8 %v1596
    %v1598 = vlaneseq
    %v1599 = vshrl.u32 %v1598, 7
    %v1600 = vsub.s32 %v1597, %v1599
    %v1601 = vrot.slane %v1510, %v1600
    %v1603 = vunpack.c.l.s4 1983009808
    %v1604 = vunpack.c.0.s8 %v1603
    %v1605 = vlaneseq
    %v1606 = vshrl.u32 %v1605, 7
    %v1607 = vsub.s32 %v1604, %v1606
    %v1608 = vrot.slane %v1594, %v1607
    %v1609 = vcombine.high %v1601, %v1601
    %v1610 = vcombine.high %v1608, %v1608
    %v1611 = vcombine.high %v1511, %v1511
    %v1613 = vunpack.c.l.s4 1983009808
    %v1614 = vunpack.c.0.s8 %v1613
    %v1615 = vlaneseq
    %v1616 = vshrl.u32 %v1615, 7
    %v1617 = vsub.s32 %v1614, %v1616
    %v1618 = vrot.slane %v1511, %v1617
    %v1620 = vunpack.c.l.s4 1983009808
    %v1621 = vunpack.c.0.s8 %v1620
    %v1622 = vlaneseq
    %v1623 = vshrl.u32 %v1622, 7
    %v1624 = vsub.s32 %v1621, %v1623
    %v1625 = vrot.slane %v1611, %v1624
    %v1626 = vcombine.high %v1618, %v1618
    %v1627 = vcombine.high %v1625, %v1625
    %v1628 = vcombine.high %v1512, %v1512
    %v1630 = vunpack.c.l.s4 1983009808
    %v1631 = vunpack.c.0.s8 %v1630
    %v1632 = vlaneseq
    %v1633 = vshrl.u32 %v1632, 7
    %v1634 = vsub.s32 %v1631, %v1633
    %v1635 = vrot.slane %v1512, %v1634
    %v1637 = vunpack.c.l.s4 1983009808
    %v1638 = vunpack.c.0.s8 %v1637
    %v1639 = vlaneseq
    %v1640 = vshrl.u32 %v1639, 7
    %v1641 = vsub.s32 %v1638, %v1640
    %v1642 = vrot.slane %v1628, %v1641
    %v1643 = vcombine.high %v1635, %v1635
    %v1644 = vcombine.high %v1642, %v1642
    %v1645 = vcombine.high %v1513, %v1513
    %v1647 = vunpack.c.l.s4 1983009808
    %v1648 = vunpack.c.0.s8 %v1647
    %v1649 = vlaneseq
    %v1650 = vshrl.u32 %v1649, 7
    %v1651 = vsub.s32 %v1648, %v1650
    %v1652 = vrot.slane %v1513, %v1651
    %v1654 = vunpack.c.l.s4 1983009808
    %v1655 = vunpack.c.0.s8 %v1654
    %v1656 = vlaneseq
    %v1657 = vshrl.u32 %v1656, 7
    %v1658 = vsub.s32 %v1655, %v1657
    %v1659 = vrot.slane %v1645, %v1658
    %v1660 = vcombine.high %v1652, %v1652
    %v1661 = vcombine.high %v1659, %v1659
    %v1662 = vcombine.high %v1514, %v1514
    %v1664 = vunpack.c.l.s4 1983009808
    %v1665 = vunpack.c.0.s8 %v1664
    %v1666 = vlaneseq
    %v1667 = vshrl.u32 %v1666, 7
    %v1668 = vsub.s32 %v1665, %v1667
    %v1669 = vrot.slane %v1514, %v1668
    %v1671 = vunpack.c.l.s4 1983009808
    %v1672 = vunpack.c.0.s8 %v1671
    %v1673 = vlaneseq
    %v1674 = vshrl.u32 %v1673, 7
    %v1675 = vsub.s32 %v1672, %v1674
    %v1676 = vrot.slane %v1662, %v1675
    %v1677 = vcombine.high %v1669, %v1669
    %v1678 = vcombine.high %v1676, %v1676
    %v1679 = vcombine.high %v1515, %v1515
    %v1681 = vunpack.c.l.s4 1983009808
    %v1682 = vunpack.c.0.s8 %v1681
    %v1683 = vlaneseq
    %v1684 = vshrl.u32 %v1683, 7
    %v1685 = vsub.s32 %v1682, %v1684
    %v1686 = vrot.slane %v1515, %v1685
    %v1688 = vunpack.c.l.s4 1983009808
    %v1689 = vunpack.c.0.s8 %v1688
    %v1690 = vlaneseq
    %v1691 = vshrl.u32 %v1690, 7
    %v1692 = vsub.s32 %v1689, %v1691
    %v1693 = vrot.slane %v1679, %v1692
    %v1694 = vcombine.high %v1686, %v1686
    %v1695 = vcombine.high %v1693, %v1693
    %v1696 = vcombine.low %v1533, %v1541
    %v1697 = vcombine.low %v1540, %v1542
    %v1699 = vunpack.c.l.s4 1983009808
    %v1700 = vunpack.c.0.s8 %v1699
    %v1701 = vlaneseq
    %v1702 = vshrl.u32 %v1701, 7
    %v1703 = vsub.s32 %v1700, %v1702
    %v1704 = vrot.slane %v1696, %v1703
    %v1706 = vunpack.c.l.s4 1983009808
    %v1707 = vunpack.c.0.s8 %v1706
    %v1708 = vlaneseq
    %v1709 = vshrl.u32 %v1708, 7
    %v1710 = vsub.s32 %v1707, %v1709
    %v1711 = vrot.slane %v1697, %v1710
    %v1712 = vcombine.low %v1704, %v1711
    %v1713 = vcombine.low %v1558, %v1557
    %v1714 = vcombine.low %v1559, %v1567
    %v1716 = vunpack.c.l.s4 1983009808
    %v1717 = vunpack.c.0.s8 %v1716
    %v1718 = vlaneseq
    %v1719 = vshrl.u32 %v1718, 7
    %v1720 = vsub.s32 %v1717, %v1719
    %v1721 = vrot.slane %v1713, %v1720
    %v1723 = vunpack.c.l.s4 1983009808
    %v1724 = vunpack.c.0.s8 %v1723
    %v1725 = vlaneseq
    %v1726 = vshrl.u32 %v1725, 7
    %v1727 = vsub.s32 %v1724, %v1726
    %v1728 = vrot.slane %v1714, %v1727
    %v1729 = vcombine.low %v1721, %v1728
    %v1730 = vcombine.low %v1574, %v1576
    %v1731 = vcombine.low %v1584, %v1592
    %v1733 = vunpack.c.l.s4 1983009808
    %v1734 = vunpack.c.0.s8 %v1733
    %v1735 = vlaneseq
    %v1736 = vshrl.u32 %v1735, 7
    %v1737 = vsub.s32 %v1734, %v1736
    %v1738 = vrot.slane %v1730, %v1737
    %v1740 = vunpack.c.l.s4 1983009808
    %v1741 = vunpack.c.0.s8 %v1740
    %v1742 = vlaneseq
    %v1743 = vshrl.u32 %v1742, 7
    %v1744 = vsub.s32 %v1741, %v1743
    %v1745 = vrot.slane %v1731, %v1744
    %v1746 = vcombine.low %v1738, %v1745
    %v1747 = vcombine.low %v1593, %v1601
    %v1748 = vcombine.low %v1609, %v1608
    %v1750 = vunpack.c.l.s4 1983009808
    %v1751 = vunpack.c.0.s8 %v1750
    %v1752 = vlaneseq
    %v1753 = vshrl.u32 %v1752, 7
    %v1754 = vsub.s32 %v1751, %v1753
    %v1755 = vrot.slane %v1747, %v1754
    %v1757 = vunpack.c.l.s4 1983009808
    %v1758 = vunpack.c.0.s8 %v1757
    %v1759 = vlaneseq
    %v1760 = vshrl.u32 %v1759, 7
    %v1761 = vsub.s32 %v1758, %v1760
    %v1762 = vrot.slane %v1748, %v1761
    %v1763 = vcombine.low %v1755, %v1762
    %v1764 = vcombine.low %v1618, %v1626
    %v1765 = vcombine.low %v1625, %v1627
    %v1767 = vunpack.c.l.s4 1983009808
    %v1768 = vunpack.c.0.s8 %v1767
    %v1769 = vlaneseq
    %v1770 = vshrl.u32 %v1769, 7
    %v1771 = vsub.s32 %v1768, %v1770
    %v1772 = vrot.slane %v1764, %v1771
    %v1774 = vunpack.c.l.s4 1983009808
    %v1775 = vunpack.c.0.s8 %v1774
    %v1776 = vlaneseq
    %v1777 = vshrl.u32 %v1776, 7
    %v1778 = vsub.s32 %v1775, %v1777
    %v1779 = vrot.slane %v1765, %v1778
    %v1780 = vcombine.low %v1772, %v1779
    %v1781 = vcombine.low %v1643, %v1642
    %v1782 = vcombine.low %v1644, %v1652
    %v1784 = vunpack.c.l.s4 1983009808
    %v1785 = vunpack.c.0.s8 %v1784
    %v1786 = vlaneseq
    %v1787 = vshrl.u32 %v1786, 7
    %v1788 = vsub.s32 %v1785, %v1787
    %v1789 = vrot.slane %v1781, %v1788
    %v1791 = vunpack.c.l.s4 1983009808
    %v1792 = vunpack.c.0.s8 %v1791
    %v1793 = vlaneseq
    %v1794 = vshrl.u32 %v1793, 7
    %v1795 = vsub.s32 %v1792, %v1794
    %v1796 = vrot.slane %v1782, %v1795
    %v1797 = vcombine.low %v1789, %v1796
    %v1798 = vcombine.low %v1659, %v1661
    %v1799 = vcombine.low %v1669, %v1677
    %v1801 = vunpack.c.l.s4 1983009808
    %v1802 = vunpack.c.0.s8 %v1801
    %v1803 = vlaneseq
    %v1804 = vshrl.u32 %v1803, 7
    %v1805 = vsub.s32 %v1802, %v1804
    %v1806 = vrot.slane %v1798, %v1805
    %v1808 = vunpack.c.l.s4 1983009808
    %v1809 = vunpack.c.0.s8 %v1808
    %v1810 = vlaneseq
    %v1811 = vshrl.u32 %v1810, 7
    %v1812 = vsub.s32 %v1809, %v1811
    %v1813 = vrot.slane %v1799, %v1812
    %v1814 = vcombine.low %v1806, %v1813
    %v1815 = vcombine.low %v1678, %v1686
    %v1816 = vcombine.low %v1694, %v1693
    %v1818 = vunpack.c.l.s4 1983009808
    %v1819 = vunpack.c.0.s8 %v1818
    %v1820 = vlaneseq
    %v1821 = vshrl.u32 %v1820, 7
    %v1822 = vsub.s32 %v1819, %v1821
    %v1823 = vrot.slane %v1815, %v1822
    %v1825 = vunpack.c.l.s4 1983009808
    %v1826 = vunpack.c.0.s8 %v1825
    %v1827 = vlaneseq
    %v1828 = vshrl.u32 %v1827, 7
    %v1829 = vsub.s32 %v1826, %v1828
    %v1830 = vrot.slane %v1816, %v1829
    %v1831 = vcombine.low %v1823, %v1830
    %v1841 = vunpack.c.l.s4 1983009808
    %v1842 = vunpack.c.0.s8 %v1841
    %v1843 = vlaneseq
    %v1844 = vshrl.u32 %v1843, 7
    %v1845 = vsub.s32 %v1842, %v1844
    %v1846 = vrot.slane %v1550, %v1845
    %v1848 = vunpack.c.l.s4 1983009808
    %v1849 = vunpack.c.0.s8 %v1848
    %v1850 = vlaneseq
    %v1851 = vshrl.u32 %v1850, 7
    %v1852 = vsub.s32 %v1849, %v1851
    %v1853 = vrot.slane %v1575, %v1852
    %v1855 = vunpack.c.l.s4 1983009808
    %v1856 = vunpack.c.0.s8 %v1855
    %v1857 = vlaneseq
    %v1858 = vshrl.u32 %v1857, 7
    %v1859 = vsub.s32 %v1856, %v1858
    %v1860 = vrot.slane %v1591, %v1859
    %v1862 = vunpack.c.l.s4 1983009808
    %v1863 = vunpack.c.0.s8 %v1862
    %v1864 = vlaneseq
    %v1865 = vshrl.u32 %v1864, 7
    %v1866 = vsub.s32 %v1863, %v1865
    %v1867 = vrot.slane %v1610, %v1866
    %v1869 = vunpack.c.l.s4 1983009808
    %v1870 = vunpack.c.0.s8 %v1869
    %v1871 = vlaneseq
    %v1872 = vshrl.u32 %v1871, 7
    %v1873 = vsub.s32 %v1870, %v1872
    %v1874 = vrot.slane %v1635, %v1873
    %v1876 = vunpack.c.l.s4 1983009808
    %v1877 = vunpack.c.0.s8 %v1876
    %v1878 = vlaneseq
    %v1879 = vshrl.u32 %v1878, 7
    %v1880 = vsub.s32 %v1877, %v1879
    %v1881 = vrot.slane %v1660, %v1880
    %v1883 = vunpack.c.l.s4 1983009808
    %v1884 = vunpack.c.0.s8 %v1883
    %v1885 = vlaneseq
    %v1886 = vshrl.u32 %v1885, 7
    %v1887 = vsub.s32 %v1884, %v1886
    %v1888 = vrot.slane %v1676, %v1887
    %v1890 = vunpack.c.l.s4 1983009808
    %v1891 = vunpack.c.0.s8 %v1890
    %v1892 = vlaneseq
    %v1893 = vshrl.u32 %v1892, 7
    %v1894 = vsub.s32 %v1891, %v1893
    %v1895 = vrot.slane %v1695, %v1894
    %v1896 = vrot.slane %v1712, 1
    %v1897 = vrot.slane %v1846, 1
    %v1898 = vsel %vm207, %v1896, %v1897
    %v1899 = vrot.slane %v1729, 1
    %v1900 = vrot.slane %v1853, 1
    %v1901 = vsel %vm207, %v1899, %v1900
    %v1902 = vrot.slane %v1746, 1
    %v1903 = vrot.slane %v1860, 1
    %v1904 = vsel %vm207, %v1902, %v1903
    %v1905 = vrot.slane %v1763, 1
    %v1906 = vrot.slane %v1867, 1
    %v1907 = vsel %vm207, %v1905, %v1906
    %v1908 = vrot.slane %v1780, 1
    %v1909 = vrot.slane %v1874, 1
    %v1910 = vsel %vm207, %v1908, %v1909
    %v1911 = vrot.slane %v1797, 1
    %v1912 = vrot.slane %v1881, 1
    %v1913 = vsel %vm207, %v1911, %v1912
    %v1914 = vrot.slane %v1814, 1
    %v1915 = vrot.slane %v1888, 1
    %v1916 = vsel %vm207, %v1914, %v1915
    %v1917 = vrot.slane %v1831, 1
    %v1918 = vrot.slane %v1895, 1
    %v1919 = vsel %vm207, %v1917, %v1918
    %1920 = vrot.lane.b32.xlu0 %v1898, 16
    %v1921 = vpop.permute.xlu0 %1920
    %1922 = vrot.lane.b32.xlu0 %v1901, 16
    %v1923 = vpop.permute.xlu0 %1922
    %1924 = vrot.lane.b32.xlu0 %v1904, 16
    %v1925 = vpop.permute.xlu0 %1924
    %1926 = vrot.lane.b32.xlu0 %v1907, 16
    %v1927 = vpop.permute.xlu0 %1926
    %1928 = vrot.lane.b32.xlu0 %v1910, 16
    %v1929 = vpop.permute.xlu0 %1928
    %1930 = vrot.lane.b32.xlu0 %v1913, 16
    %v1931 = vpop.permute.xlu0 %1930
    %1932 = vrot.lane.b32.xlu0 %v1916, 16
    %v1933 = vpop.permute.xlu0 %1932
    %1934 = vrot.lane.b32.xlu0 %v1919, 16
    %v1935 = vpop.permute.xlu0 %1934
    %v1944 = vcombine.low %v1541, %v1540
    %v1945 = vcombine.low %v1542, %v1550
    %v1947 = vunpack.c.l.s4 1983009808
    %v1948 = vunpack.c.0.s8 %v1947
    %v1949 = vlaneseq
    %v1950 = vshrl.u32 %v1949, 7
    %v1951 = vsub.s32 %v1948, %v1950
    %v1952 = vrot.slane %v1944, %v1951
    %v1954 = vunpack.c.l.s4 1983009808
    %v1955 = vunpack.c.0.s8 %v1954
    %v1956 = vlaneseq
    %v1957 = vshrl.u32 %v1956, 7
    %v1958 = vsub.s32 %v1955, %v1957
    %v1959 = vrot.slane %v1945, %v1958
    %v1960 = vcombine.low %v1952, %v1959
    %v1961 = vcombine.low %v1557, %v1559
    %v1962 = vcombine.low %v1567, %v1575
    %v1964 = vunpack.c.l.s4 1983009808
    %v1965 = vunpack.c.0.s8 %v1964
    %v1966 = vlaneseq
    %v1967 = vshrl.u32 %v1966, 7
    %v1968 = vsub.s32 %v1965, %v1967
    %v1969 = vrot.slane %v1961, %v1968
    %v1971 = vunpack.c.l.s4 1983009808
    %v1972 = vunpack.c.0.s8 %v1971
    %v1973 = vlaneseq
    %v1974 = vshrl.u32 %v1973, 7
    %v1975 = vsub.s32 %v1972, %v1974
    %v1976 = vrot.slane %v1962, %v1975
    %v1977 = vcombine.low %v1969, %v1976
    %v1978 = vcombine.low %v1576, %v1584
    %v1979 = vcombine.low %v1592, %v1591
    %v1981 = vunpack.c.l.s4 1983009808
    %v1982 = vunpack.c.0.s8 %v1981
    %v1983 = vlaneseq
    %v1984 = vshrl.u32 %v1983, 7
    %v1985 = vsub.s32 %v1982, %v1984
    %v1986 = vrot.slane %v1978, %v1985
    %v1988 = vunpack.c.l.s4 1983009808
    %v1989 = vunpack.c.0.s8 %v1988
    %v1990 = vlaneseq
    %v1991 = vshrl.u32 %v1990, 7
    %v1992 = vsub.s32 %v1989, %v1991
    %v1993 = vrot.slane %v1979, %v1992
    %v1994 = vcombine.low %v1986, %v1993
    %v1995 = vcombine.low %v1601, %v1609
    %v1996 = vcombine.low %v1608, %v1610
    %v1998 = vunpack.c.l.s4 1983009808
    %v1999 = vunpack.c.0.s8 %v1998
    %v2000 = vlaneseq
    %v2001 = vshrl.u32 %v2000, 7
    %v2002 = vsub.s32 %v1999, %v2001
    %v2003 = vrot.slane %v1995, %v2002
    %v2005 = vunpack.c.l.s4 1983009808
    %v2006 = vunpack.c.0.s8 %v2005
    %v2007 = vlaneseq
    %v2008 = vshrl.u32 %v2007, 7
    %v2009 = vsub.s32 %v2006, %v2008
    %v2010 = vrot.slane %v1996, %v2009
    %v2011 = vcombine.low %v2003, %v2010
    %v2012 = vcombine.low %v1626, %v1625
    %v2013 = vcombine.low %v1627, %v1635
    %v2015 = vunpack.c.l.s4 1983009808
    %v2016 = vunpack.c.0.s8 %v2015
    %v2017 = vlaneseq
    %v2018 = vshrl.u32 %v2017, 7
    %v2019 = vsub.s32 %v2016, %v2018
    %v2020 = vrot.slane %v2012, %v2019
    %v2022 = vunpack.c.l.s4 1983009808
    %v2023 = vunpack.c.0.s8 %v2022
    %v2024 = vlaneseq
    %v2025 = vshrl.u32 %v2024, 7
    %v2026 = vsub.s32 %v2023, %v2025
    %v2027 = vrot.slane %v2013, %v2026
    %v2028 = vcombine.low %v2020, %v2027
    %v2029 = vcombine.low %v1642, %v1644
    %v2030 = vcombine.low %v1652, %v1660
    %v2032 = vunpack.c.l.s4 1983009808
    %v2033 = vunpack.c.0.s8 %v2032
    %v2034 = vlaneseq
    %v2035 = vshrl.u32 %v2034, 7
    %v2036 = vsub.s32 %v2033, %v2035
    %v2037 = vrot.slane %v2029, %v2036
    %v2039 = vunpack.c.l.s4 1983009808
    %v2040 = vunpack.c.0.s8 %v2039
    %v2041 = vlaneseq
    %v2042 = vshrl.u32 %v2041, 7
    %v2043 = vsub.s32 %v2040, %v2042
    %v2044 = vrot.slane %v2030, %v2043
    %v2045 = vcombine.low %v2037, %v2044
    %v2046 = vcombine.low %v1661, %v1669
    %v2047 = vcombine.low %v1677, %v1676
    %v2049 = vunpack.c.l.s4 1983009808
    %v2050 = vunpack.c.0.s8 %v2049
    %v2051 = vlaneseq
    %v2052 = vshrl.u32 %v2051, 7
    %v2053 = vsub.s32 %v2050, %v2052
    %v2054 = vrot.slane %v2046, %v2053
    %v2056 = vunpack.c.l.s4 1983009808
    %v2057 = vunpack.c.0.s8 %v2056
    %v2058 = vlaneseq
    %v2059 = vshrl.u32 %v2058, 7
    %v2060 = vsub.s32 %v2057, %v2059
    %v2061 = vrot.slane %v2047, %v2060
    %v2062 = vcombine.low %v2054, %v2061
    %v2063 = vcombine.low %v1686, %v1694
    %v2064 = vcombine.low %v1693, %v1695
    %v2066 = vunpack.c.l.s4 1983009808
    %v2067 = vunpack.c.0.s8 %v2066
    %v2068 = vlaneseq
    %v2069 = vshrl.u32 %v2068, 7
    %v2070 = vsub.s32 %v2067, %v2069
    %v2071 = vrot.slane %v2063, %v2070
    %v2073 = vunpack.c.l.s4 1983009808
    %v2074 = vunpack.c.0.s8 %v2073
    %v2075 = vlaneseq
    %v2076 = vshrl.u32 %v2075, 7
    %v2077 = vsub.s32 %v2074, %v2076
    %v2078 = vrot.slane %v2064, %v2077
    %v2079 = vcombine.low %v2071, %v2078
    %2080 = vrot.lane.b32.xlu0 %v1960, 32
    %v2081 = vpop.permute.xlu0 %2080
    %2082 = vrot.lane.b32.xlu0 %v1977, 32
    %v2083 = vpop.permute.xlu0 %2082
    %2084 = vrot.lane.b32.xlu0 %v1994, 32
    %v2085 = vpop.permute.xlu0 %2084
    %2086 = vrot.lane.b32.xlu0 %v2011, 32
    %v2087 = vpop.permute.xlu0 %2086
    %2088 = vrot.lane.b32.xlu0 %v2028, 32
    %v2089 = vpop.permute.xlu0 %2088
    %2090 = vrot.lane.b32.xlu0 %v2045, 32
    %v2091 = vpop.permute.xlu0 %2090
    %2092 = vrot.lane.b32.xlu0 %v2062, 32
    %v2093 = vpop.permute.xlu0 %2092
    %2094 = vrot.lane.b32.xlu0 %v2079, 32
    %v2095 = vpop.permute.xlu0 %2094
    %v2104 = vsel %vm533, %v1712, %v1921
    %v2105 = vsel %vm533, %v1729, %v1923
    %v2106 = vsel %vm533, %v1746, %v1925
    %v2107 = vsel %vm533, %v1763, %v1927
    %v2108 = vsel %vm533, %v1780, %v1929
    %v2109 = vsel %vm533, %v1797, %v1931
    %v2110 = vsel %vm533, %v1814, %v1933
    %v2111 = vsel %vm533, %v1831, %v1935
    %v2112 = vsel %vm550, %v2104, %v2081
    %v2113 = vsel %vm550, %v2105, %v2083
    %v2114 = vsel %vm550, %v2106, %v2085
    %v2115 = vsel %vm550, %v2107, %v2087
    %v2116 = vsel %vm550, %v2108, %v2089
    %v2117 = vsel %vm550, %v2109, %v2091
    %v2118 = vsel %vm550, %v2110, %v2093
    %v2119 = vsel %vm550, %v2111, %v2095
    %v2120 = vlaneseq
    %v2121 = vshrl.u32 %v2120, 7
    %v2122 = vsub.s32 3, %v2121
    %v2123 = vrot.slane %v31, %v2122
    %v2125 = vsel %vm607, %v2112, 0
    %v2128 = vsel %vm607, %v2113, 0
    %v2131 = vsel %vm607, %v2114, 0
    %v2134 = vsel %vm607, %v2115, 0
    %v2137 = vsel %vm607, %v2116, 0
    %v2140 = vsel %vm607, %v2117, 0
    %v2143 = vsel %vm607, %v2118, 0
    %v2146 = vsel %vm607, %v2119, 0
    %2148 = vmatprep.subr.mxu0 0.0
    %2149 = vmatpush1.msra.mxu0 %v45
    %2150 = vmatprep.subr.mxu0 0.0
    %2151 = vmatpush1.msra.mxu0 %v46
    %2152 = vmatprep.subr.mxu0 0.0
    %2153 = vmatpush1.msra.mxu0 %v47
    %2154 = vmatprep.subr.mxu0 0.0
    %2155 = vmatpush1.msra.mxu0 %v48
    %2156 = vmatprep.subr.mxu0 0.0
    %2157 = vmatpush1.msra.mxu0 %v49
    %2158 = vmatprep.subr.mxu0 0.0
    %2159 = vmatpush1.msra.mxu0 %v50
    %2160 = vmatprep.subr.mxu0 0.0
    %2161 = vmatpush1.msra.mxu0 0.0
    %2162 = vmatprep.subr.mxu0 0.0
    %2163 = vmatpush1.msra.mxu0 0.0
    %2164 = vmatprep.subr.mxu0 0.0
    %2165 = vmatpush1.msra.mxu0 0.0
    %2166 = vmatprep.subr.mxu0 0.0
    %2167 = vmatpush1.msra.mxu0 0.0
    %2168 = vmatprep.subr.mxu0 0.0
    %2169 = vmatpush1.msra.mxu0 0.0
    %2170 = vmatprep.subr.mxu0 0.0
    %2171 = vmatpush1.msra.mxu0 0.0
    %2172 = vmatprep.subr.mxu0 0.0
    %2173 = vmatpush1.msra.mxu0 0.0
    %2174 = vmatprep.subr.mxu0 0.0
    %2175 = vmatpush1.msra.mxu0 0.0
    %2176 = vmatprep.subr.mxu0 0.0
    %2177 = vmatpush1.msra.mxu0 0.0
    %2178 = vmatprep.subr.mxu0 0.0
    %2179 = vmatpush1.msra.mxu0 0.0
    %2180 = vmatprep.subr.mxu0 0.0
    %2181 = vmatpush1.msra.mxu0 0.0
    %2182 = vmatprep.subr.mxu0 0.0
    %2183 = vmatpush1.msra.mxu0 0.0
    %2184 = vmatprep.subr.mxu0 0.0
    %2185 = vmatpush1.msra.mxu0 0.0
    %2186 = vmatprep.subr.mxu0 0.0
    %2187 = vmatpush1.msra.mxu0 0.0
    %2188 = vmatprep.subr.mxu0 0.0
    %2189 = vmatpush1.msra.mxu0 0.0
    %2190 = vmatprep.subr.mxu0 0.0
    %2191 = vmatpush1.msra.mxu0 0.0
    %2192 = vmatprep.subr.mxu0 0.0
    %2193 = vmatpush1.msra.mxu0 0.0
    %2194 = vmatprep.subr.mxu0 0.0
    %2195 = vmatpush1.msra.mxu0 0.0
    %2196 = vmatprep.subr.mxu0 0.0
    %2197 = vmatpush1.msra.mxu0 0.0
    %2198 = vmatprep.subr.mxu0 0.0
    %2199 = vmatpush1.msra.mxu0 0.0
    %2200 = vmatprep.subr.mxu0 0.0
    %2201 = vmatpush1.msra.mxu0 0.0
    %2202 = vmatprep.subr.mxu0 0.0
    %2203 = vmatpush1.msra.mxu0 0.0
    %2204 = vmatprep.subr.mxu0 0.0
    %2205 = vmatpush1.msra.mxu0 0.0
    %2206 = vmatprep.subr.mxu0 0.0
    %2207 = vmatpush1.msra.mxu0 0.0
    %2208 = vmatprep.subr.mxu0 0.0
    %2209 = vmatpush1.msra.mxu0 0.0
    %2210 = vmatprep.subr.mxu0 0.0
    %2211 = vmatpush1.msra.mxu0 0.0
    %2212 = vmatprep.mubr.f32.mxu0 0.0
    %2213 = vmatmul.mubr.f32.gmra.mrb[0].mxu0 %v2125
    %v2214 = vpop.f32.mrb[0].mxu0
    %v2215 = vadd.f32 %v2123, %v2214
    %v2216 = vpop.f32.mrb[0].mxu0
    %2217 = vmatprep.mubr.f32.mxu0 0.0
    %2218 = vmatmul.mubr.f32.gmra.mrb[0].mxu0 %v2128
    %v2219 = vpop.f32.mrb[0].mxu0
    %v2220 = vadd.f32 %v2123, %v2219
    %v2221 = vpop.f32.mrb[0].mxu0
    %2222 = vmatprep.mubr.f32.mxu0 0.0
    %2223 = vmatmul.mubr.f32.gmra.mrb[0].mxu0 %v2131
    %v2224 = vpop.f32.mrb[0].mxu0
    %v2225 = vadd.f32 %v2123, %v2224
    %v2226 = vpop.f32.mrb[0].mxu0
    %2227 = vmatprep.mubr.f32.mxu0 0.0
    %2228 = vmatmul.mubr.f32.gmra.mrb[0].mxu0 %v2134
    %v2229 = vpop.f32.mrb[0].mxu0
    %v2230 = vadd.f32 %v2123, %v2229
    %v2231 = vpop.f32.mrb[0].mxu0
    %2232 = vmatprep.mubr.f32.mxu0 0.0
    %2233 = vmatmul.mubr.f32.gmra.mrb[0].mxu0 %v2137
    %v2234 = vpop.f32.mrb[0].mxu0
    %v2235 = vadd.f32 %v2123, %v2234
    %v2236 = vpop.f32.mrb[0].mxu0
    %2237 = vmatprep.mubr.f32.mxu0 0.0
    %2238 = vmatmul.mubr.f32.gmra.mrb[0].mxu0 %v2140
    %v2239 = vpop.f32.mrb[0].mxu0
    %v2240 = vadd.f32 %v2123, %v2239
    %v2241 = vpop.f32.mrb[0].mxu0
    %2242 = vmatprep.mubr.f32.mxu0 0.0
    %2243 = vmatmul.mubr.f32.gmra.mrb[0].mxu0 %v2143
    %v2244 = vpop.f32.mrb[0].mxu0
    %v2245 = vadd.f32 %v2123, %v2244
    %v2246 = vpop.f32.mrb[0].mxu0
    %2247 = vmatprep.mubr.f32.mxu0 0.0
    %2248 = vmatmul.mubr.f32.gmra.mrb[0].mxu0 %v2146
    %v2249 = vpop.f32.mrb[0].mxu0
    %v2250 = vadd.f32 %v2123, %v2249
    %v2251 = vpop.f32.mrb[0].mxu0
    %2252 = vdwg.mxu0
    %v2253 = vmax.f32 %v2215, 0.0
    %v2254 = vmax.f32 %v2220, 0.0
    %v2255 = vmax.f32 %v2225, 0.0
    %v2256 = vmax.f32 %v2230, 0.0
    %v2257 = vmax.f32 %v2235, 0.0
    %v2258 = vmax.f32 %v2240, 0.0
    %v2259 = vmax.f32 %v2245, 0.0
    %v2260 = vmax.f32 %v2250, 0.0
    %v2261 = vld [vmem:[%s2] sm:$0xff]
    %v2262 = vld [vmem:[%s2 + $0x8] sm:$0xff]
    %v2263 = vld [vmem:[%s2 + $0x10] sm:$0xff]
    %v2264 = vld [vmem:[%s2 + $0x18] sm:$0xff]
    %v2265 = vld [vmem:[%s2 + $0x20] sm:$0xff]
    %v2266 = vld [vmem:[%s2 + $0x28] sm:$0xff]
    %v2267 = vld [vmem:[%s2 + $0x30] sm:$0xff]
    %v2268 = vld [vmem:[%s2 + $0x38] sm:$0xff]
    %v2269 = vld [vmem:[%s2 + $0x40] sm:$0xff]
    %v2270 = vld [vmem:[%s2 + $0x48] sm:$0xff]
    %v2271 = vld [vmem:[%s2 + $0x50] sm:$0xff]
    %v2272 = vld [vmem:[%s2 + $0x58] sm:$0xff]
    %v2273 = vld [vmem:[%s2 + $0x60] sm:$0x1]
    %v2274 = vld [vmem:[%s2 + $0x68] sm:$0xff]
    %v2275 = vld [vmem:[%s2 + $0x70] sm:$0xff]
    %v2276 = vld [vmem:[%s2 + $0x78] sm:$0xff]
    %v2277 = vld [vmem:[%s2 + $0x80] sm:$0xff]
    %v2278 = vld [vmem:[%s2 + $0x88] sm:$0x1]
    %2281 = vrot.lane.b32.xlu0 %v2254, 16
    %v2282 = vpop.permute.xlu0 %2281
    %2283 = vrot.lane.b32.xlu0 %v2258, 16
    %v2284 = vpop.permute.xlu0 %2283
    %2289 = vrot.lane.b32.xlu0 %v2255, 32
    %v2290 = vpop.permute.xlu0 %2289
    %2291 = vrot.lane.b32.xlu0 %v2259, 32
    %v2292 = vpop.permute.xlu0 %2291
    %2297 = vrot.lane.b32.xlu0 %v2256, 48
    %v2298 = vpop.permute.xlu0 %2297
    %2299 = vrot.lane.b32.xlu0 %v2260, 48
    %v2300 = vpop.permute.xlu0 %2299
    %v2303 = vsel %vm533, %v2253, %v2282
    %v2304 = vsel %vm533, %v2257, %v2284
    %v2305 = vsel %vm550, %v2303, %v2290
    %v2306 = vsel %vm550, %v2304, %v2292
    %v2307 = vsel %vm607, %v2305, %v2298
    %v2308 = vsel %vm607, %v2306, %v2300
    %v2309 = vlaneseq
    %v2310 = vshrl.u32 %v2309, 7
    %v2311 = vsub.s32 0, %v2310
    %v2312 = vrot.slane %v2273, %v2311
    %vm2313 = vcmask 523264
    %v2315 = vsel %vm2313, %v2307, 0
    %v2318 = vsel %vm2313, %v2308, 0
    %2320 = vmatprep.subr.mxu0 0.0
    %2321 = vmatpush1.msra.mxu0 %v2261
    %2322 = vmatprep.subr.mxu0 0.0
    %2323 = vmatpush1.msra.mxu0 %v2262
    %2324 = vmatprep.subr.mxu0 0.0
    %2325 = vmatpush1.msra.mxu0 %v2263
    %2326 = vmatprep.subr.mxu0 0.0
    %2327 = vmatpush1.msra.mxu0 %v2264
    %2328 = vmatprep.subr.mxu0 0.0
    %2329 = vmatpush1.msra.mxu0 %v2265
    %2330 = vmatprep.subr.mxu0 0.0
    %2331 = vmatpush1.msra.mxu0 %v2266
    %2332 = vmatprep.subr.mxu0 0.0
    %2333 = vmatpush1.msra.mxu0 %v2267
    %2334 = vmatprep.subr.mxu0 0.0
    %2335 = vmatpush1.msra.mxu0 %v2268
    %2336 = vmatprep.subr.mxu0 0.0
    %2337 = vmatpush1.msra.mxu0 0.0
    %2338 = vmatprep.subr.mxu0 0.0
    %2339 = vmatpush1.msra.mxu0 0.0
    %2340 = vmatprep.subr.mxu0 0.0
    %2341 = vmatpush1.msra.mxu0 0.0
    %2342 = vmatprep.subr.mxu0 0.0
    %2343 = vmatpush1.msra.mxu0 0.0
    %2344 = vmatprep.subr.mxu0 0.0
    %2345 = vmatpush1.msra.mxu0 0.0
    %2346 = vmatprep.subr.mxu0 0.0
    %2347 = vmatpush1.msra.mxu0 0.0
    %2348 = vmatprep.subr.mxu0 0.0
    %2349 = vmatpush1.msra.mxu0 0.0
    %2350 = vmatprep.subr.mxu0 0.0
    %2351 = vmatpush1.msra.mxu0 0.0
    %2352 = vmatprep.subr.mxu0 0.0
    %2353 = vmatpush1.msra.mxu0 0.0
    %2354 = vmatprep.subr.mxu0 0.0
    %2355 = vmatpush1.msra.mxu0 0.0
    %2356 = vmatprep.subr.mxu0 0.0
    %2357 = vmatpush1.msra.mxu0 0.0
    %2358 = vmatprep.subr.mxu0 0.0
    %2359 = vmatpush1.msra.mxu0 0.0
    %2360 = vmatprep.subr.mxu0 0.0
    %2361 = vmatpush1.msra.mxu0 0.0
    %2362 = vmatprep.subr.mxu0 0.0
    %2363 = vmatpush1.msra.mxu0 0.0
    %2364 = vmatprep.subr.mxu0 0.0
    %2365 = vmatpush1.msra.mxu0 0.0
    %2366 = vmatprep.subr.mxu0 0.0
    %2367 = vmatpush1.msra.mxu0 0.0
    %2368 = vmatprep.subr.mxu0 0.0
    %2369 = vmatpush1.msra.mxu0 0.0
    %2370 = vmatprep.subr.mxu0 0.0
    %2371 = vmatpush1.msra.mxu0 0.0
    %2372 = vmatprep.subr.mxu0 0.0
    %2373 = vmatpush1.msra.mxu0 0.0
    %2374 = vmatprep.subr.mxu0 0.0
    %2375 = vmatpush1.msra.mxu0 0.0
    %2376 = vmatprep.subr.mxu0 0.0
    %2377 = vmatpush1.msra.mxu0 0.0
    %2378 = vmatprep.subr.mxu0 0.0
    %2379 = vmatpush1.msra.mxu0 0.0
    %2380 = vmatprep.subr.mxu0 0.0
    %2381 = vmatpush1.msra.mxu0 0.0
    %2382 = vmatprep.subr.mxu0 0.0
    %2383 = vmatpush1.msra.mxu0 0.0
    %2384 = vmatprep.mubr.f32.mxu0 0.0
    %2385 = vmatmul.mubr.f32.gmra.mrb[0].mxu0 %v2315
    %v2386 = vpop.f32.mrb[0].mxu0
    %v2387 = vadd.f32 %v2312, %v2386
    %v2388 = vpop.f32.mrb[0].mxu0
    %2389 = vmatprep.mubr.f32.mxu0 0.0
    %2390 = vmatmul.mubr.f32.gmra.mrb[0].mxu0 %v2318
    %v2391 = vpop.f32.mrb[0].mxu0
    %v2392 = vadd.f32 %v2312, %v2391
    %v2393 = vpop.f32.mrb[0].mxu0
    %2394 = vdwg.mxu0
    %v2395 = vlaneseq
    %v2396 = vand.u32 %v2395, 127
    %vm2397 = vcmp.ge.s32.totalorder %v2396, 64
    %vm2398 = vcmp.lt.s32.totalorder %v2396, 96
    %vm2399 = vmand %vm2397, %vm2398
    %v2401 = vsel %vm550, 0.0, 0
    %2403 = vmatprep.subr.mxu0 0.0
    %2404 = vmatpush1.msra.mxu0 %v2269
    %2405 = vmatprep.subr.mxu0 0.0
    %2406 = vmatpush1.msra.mxu0 %v2270
    %2407 = vmatprep.subr.mxu0 0.0
    %2408 = vmatpush1.msra.mxu0 %v2271
    %2409 = vmatprep.subr.mxu0 0.0
    %2410 = vmatpush1.msra.mxu0 %v2272
    %2411 = vmatprep.subr.mxu0 0.0
    %2412 = vmatpush1.msra.mxu0 0.0
    %2413 = vmatprep.subr.mxu0 0.0
    %2414 = vmatpush1.msra.mxu0 0.0
    %2415 = vmatprep.subr.mxu0 0.0
    %2416 = vmatpush1.msra.mxu0 0.0
    %2417 = vmatprep.subr.mxu0 0.0
    %2418 = vmatpush1.msra.mxu0 0.0
    %2419 = vmatprep.subr.mxu0 0.0
    %2420 = vmatpush1.msra.mxu0 0.0
    %2421 = vmatprep.subr.mxu0 0.0
    %2422 = vmatpush1.msra.mxu0 0.0
    %2423 = vmatprep.subr.mxu0 0.0
    %2424 = vmatpush1.msra.mxu0 0.0
    %2425 = vmatprep.subr.mxu0 0.0
    %2426 = vmatpush1.msra.mxu0 0.0
    %2427 = vmatprep.subr.mxu0 0.0
    %2428 = vmatpush1.msra.mxu0 0.0
    %2429 = vmatprep.subr.mxu0 0.0
    %2430 = vmatpush1.msra.mxu0 0.0
    %2431 = vmatprep.subr.mxu0 0.0
    %2432 = vmatpush1.msra.mxu0 0.0
    %2433 = vmatprep.subr.mxu0 0.0
    %2434 = vmatpush1.msra.mxu0 0.0
    %2435 = vmatprep.subr.mxu0 0.0
    %2436 = vmatpush1.msra.mxu0 0.0
    %2437 = vmatprep.subr.mxu0 0.0
    %2438 = vmatpush1.msra.mxu0 0.0
    %2439 = vmatprep.subr.mxu0 0.0
    %2440 = vmatpush1.msra.mxu0 0.0
    %2441 = vmatprep.subr.mxu0 0.0
    %2442 = vmatpush1.msra.mxu0 0.0
    %2443 = vmatprep.subr.mxu0 0.0
    %2444 = vmatpush1.msra.mxu0 0.0
    %2445 = vmatprep.subr.mxu0 0.0
    %2446 = vmatpush1.msra.mxu0 0.0
    %2447 = vmatprep.subr.mxu0 0.0
    %2448 = vmatpush1.msra.mxu0 0.0
    %2449 = vmatprep.subr.mxu0 0.0
    %2450 = vmatpush1.msra.mxu0 0.0
    %2451 = vmatprep.subr.mxu0 0.0
    %2452 = vmatpush1.msra.mxu0 0.0
    %2453 = vmatprep.subr.mxu0 0.0
    %2454 = vmatpush1.msra.mxu0 0.0
    %2455 = vmatprep.subr.mxu0 0.0
    %2456 = vmatpush1.msra.mxu0 0.0
    %2457 = vmatprep.subr.mxu0 0.0
    %2458 = vmatpush1.msra.mxu0 0.0
    %2459 = vmatprep.subr.mxu0 0.0
    %2460 = vmatpush1.msra.mxu0 0.0
    %2461 = vmatprep.subr.mxu0 0.0
    %2462 = vmatpush1.msra.mxu0 0.0
    %2463 = vmatprep.subr.mxu0 0.0
    %2464 = vmatpush1.msra.mxu0 0.0
    %2465 = vmatprep.subr.mxu0 0.0
    %2466 = vmatpush1.msra.mxu0 0.0
    %2467 = vmatprep.mubr.f32.mxu0 0.0
    %2468 = vmatmul.mubr.f32.gmra.mrb[0].mxu0 %v2401
    %v2469 = vpop.f32.mrb[0].mxu0
    %v2470 = vadd.f32 0.0, %v2469
    %v2471 = vpop.f32.mrb[0].mxu0
    %2472 = vdwg.mxu0
    %v2473 = vadd.f32 %v2387, %v2470
    %v2474 = vtanh.pop %v2473
    %v2475 = vxor.u32 %v2473, 2147483648
    %v2476 = vmul.f32 %v2475, 1.442695
    %v2477 = vpow.pop %v2476
    %v2478 = vadd.f32 %v2477, 1.0
    %v2479 = vrcp.pop %v2478
    %v2480 = vmul.f32 1.0, %v2479
    %v2481 = vsel %vm2399, %v2474, %v2480
    %v2482 = vmul.f32 %v2481, 0.0
    %2484 = vrot.lane.b32.xlu0 %v2481, 64
    %v2485 = vpop.permute.xlu0 %2484
    %v2487 = vmul.f32 %v2481, %v2485
    %2489 = vrot.lane.b32.xlu0 %v2487, 32
    %v2490 = vpop.permute.xlu0 %2489
    %v2492 = vadd.f32 %v2482, %v2490
    %v2493 = vtanh.pop %v2492
    %2495 = vrot.lane.b32.xlu0 %v2493, 64
    %v2496 = vpop.permute.xlu0 %2495
    %v2498 = vmul.f32 %v2481, %v2496
    %2500 = vrot.lane.b32.xlu0 %v2498, 32
    %v2501 = vpop.permute.xlu0 %2500
    %v2502 = vsel %vm550, %v2501, 0
    %2504 = vmatprep.subr.mxu0 0.0
    %2505 = vmatpush1.msra.mxu0 %v2269
    %2506 = vmatprep.subr.mxu0 0.0
    %2507 = vmatpush1.msra.mxu0 %v2270
    %2508 = vmatprep.subr.mxu0 0.0
    %2509 = vmatpush1.msra.mxu0 %v2271
    %2510 = vmatprep.subr.mxu0 0.0
    %2511 = vmatpush1.msra.mxu0 %v2272
    %2512 = vmatprep.subr.mxu0 0.0
    %2513 = vmatpush1.msra.mxu0 0.0
    %2514 = vmatprep.subr.mxu0 0.0
    %2515 = vmatpush1.msra.mxu0 0.0
    %2516 = vmatprep.subr.mxu0 0.0
    %2517 = vmatpush1.msra.mxu0 0.0
    %2518 = vmatprep.subr.mxu0 0.0
    %2519 = vmatpush1.msra.mxu0 0.0
    %2520 = vmatprep.subr.mxu0 0.0
    %2521 = vmatpush1.msra.mxu0 0.0
    %2522 = vmatprep.subr.mxu0 0.0
    %2523 = vmatpush1.msra.mxu0 0.0
    %2524 = vmatprep.subr.mxu0 0.0
    %2525 = vmatpush1.msra.mxu0 0.0
    %2526 = vmatprep.subr.mxu0 0.0
    %2527 = vmatpush1.msra.mxu0 0.0
    %2528 = vmatprep.subr.mxu0 0.0
    %2529 = vmatpush1.msra.mxu0 0.0
    %2530 = vmatprep.subr.mxu0 0.0
    %2531 = vmatpush1.msra.mxu0 0.0
    %2532 = vmatprep.subr.mxu0 0.0
    %2533 = vmatpush1.msra.mxu0 0.0
    %2534 = vmatprep.subr.mxu0 0.0
    %2535 = vmatpush1.msra.mxu0 0.0
    %2536 = vmatprep.subr.mxu0 0.0
    %2537 = vmatpush1.msra.mxu0 0.0
    %2538 = vmatprep.subr.mxu0 0.0
    %2539 = vmatpush1.msra.mxu0 0.0
    %2540 = vmatprep.subr.mxu0 0.0
    %2541 = vmatpush1.msra.mxu0 0.0
    %2542 = vmatprep.subr.mxu0 0.0
    %2543 = vmatpush1.msra.mxu0 0.0
    %2544 = vmatprep.subr.mxu0 0.0
    %2545 = vmatpush1.msra.mxu0 0.0
    %2546 = vmatprep.subr.mxu0 0.0
    %2547 = vmatpush1.msra.mxu0 0.0
    %2548 = vmatprep.subr.mxu0 0.0
    %2549 = vmatpush1.msra.mxu0 0.0
    %2550 = vmatprep.subr.mxu0 0.0
    %2551 = vmatpush1.msra.mxu0 0.0
    %2552 = vmatprep.subr.mxu0 0.0
    %2553 = vmatpush1.msra.mxu0 0.0
    %2554 = vmatprep.subr.mxu0 0.0
    %2555 = vmatpush1.msra.mxu0 0.0
    %2556 = vmatprep.subr.mxu0 0.0
    %2557 = vmatpush1.msra.mxu0 0.0
    %2558 = vmatprep.subr.mxu0 0.0
    %2559 = vmatpush1.msra.mxu0 0.0
    %2560 = vmatprep.subr.mxu0 0.0
    %2561 = vmatpush1.msra.mxu0 0.0
    %2562 = vmatprep.subr.mxu0 0.0
    %2563 = vmatpush1.msra.mxu0 0.0
    %2564 = vmatprep.subr.mxu0 0.0
    %2565 = vmatpush1.msra.mxu0 0.0
    %2566 = vmatprep.subr.mxu0 0.0
    %2567 = vmatpush1.msra.mxu0 0.0
    %2568 = vmatprep.mubr.f32.mxu0 0.0
    %2569 = vmatmul.mubr.f32.gmra.mrb[0].mxu0 %v2502
    %v2570 = vpop.f32.mrb[0].mxu0
    %v2571 = vadd.f32 0.0, %v2570
    %v2572 = vpop.f32.mrb[0].mxu0
    %2573 = vdwg.mxu0
    %v2574 = vadd.f32 %v2392, %v2571
    %v2575 = vtanh.pop %v2574
    %v2576 = vxor.u32 %v2574, 2147483648
    %v2577 = vmul.f32 %v2576, 1.442695
    %v2578 = vpow.pop %v2577
    %v2579 = vadd.f32 %v2578, 1.0
    %v2580 = vrcp.pop %v2579
    %v2581 = vmul.f32 1.0, %v2580
    %v2582 = vsel %vm2399, %v2575, %v2581
    %v2583 = vmul.f32 %v2582, %v2492
    %2585 = vrot.lane.b32.xlu0 %v2582, 64
    %v2586 = vpop.permute.xlu0 %2585
    %v2588 = vmul.f32 %v2582, %v2586
    %2590 = vrot.lane.b32.xlu0 %v2588, 32
    %v2591 = vpop.permute.xlu0 %2590
    %v2593 = vadd.f32 %v2583, %v2591
    %v2594 = vtanh.pop %v2593
    %2596 = vrot.lane.b32.xlu0 %v2594, 64
    %v2597 = vpop.permute.xlu0 %2596
    %v2599 = vmul.f32 %v2582, %v2597
    %v2600 = vrot.slane %v2498, 7
    %v2603 = vrot.slane %v2599, 6
    %vm2605 = vcmask 1040384
    %v2606 = vsel %vm2605, %v2600, %v2603
    %v2607 = vlaneseq
    %v2608 = vshrl.u32 %v2607, 7
    %v2609 = vsub.s32 0, %v2608
    %v2610 = vrot.slane %v2278, %v2609
    %2612 = vrot.lane.b32.xlu0 %v2606, 32
    %v2613 = vpop.permute.xlu0 %2612
    %v2614 = vsel %vm550, %v2613, 0
    %2616 = vmatprep.subr.mxu0 0.0
    %2617 = vmatpush1.msra.mxu0 %v2274
    %2618 = vmatprep.subr.mxu0 0.0
    %2619 = vmatpush1.msra.mxu0 %v2275
    %2620 = vmatprep.subr.mxu0 0.0
    %2621 = vmatpush1.msra.mxu0 %v2276
    %2622 = vmatprep.subr.mxu0 0.0
    %2623 = vmatpush1.msra.mxu0 %v2277
    %2624 = vmatprep.subr.mxu0 0.0
    %2625 = vmatpush1.msra.mxu0 0.0
    %2626 = vmatprep.subr.mxu0 0.0
    %2627 = vmatpush1.msra.mxu0 0.0
    %2628 = vmatprep.subr.mxu0 0.0
    %2629 = vmatpush1.msra.mxu0 0.0
    %2630 = vmatprep.subr.mxu0 0.0
    %2631 = vmatpush1.msra.mxu0 0.0
    %2632 = vmatprep.subr.mxu0 0.0
    %2633 = vmatpush1.msra.mxu0 0.0
    %2634 = vmatprep.subr.mxu0 0.0
    %2635 = vmatpush1.msra.mxu0 0.0
    %2636 = vmatprep.subr.mxu0 0.0
    %2637 = vmatpush1.msra.mxu0 0.0
    %2638 = vmatprep.subr.mxu0 0.0
    %2639 = vmatpush1.msra.mxu0 0.0
    %2640 = vmatprep.subr.mxu0 0.0
    %2641 = vmatpush1.msra.mxu0 0.0
    %2642 = vmatprep.subr.mxu0 0.0
    %2643 = vmatpush1.msra.mxu0 0.0
    %2644 = vmatprep.subr.mxu0 0.0
    %2645 = vmatpush1.msra.mxu0 0.0
    %2646 = vmatprep.subr.mxu0 0.0
    %2647 = vmatpush1.msra.mxu0 0.0
    %2648 = vmatprep.subr.mxu0 0.0
    %2649 = vmatpush1.msra.mxu0 0.0
    %2650 = vmatprep.subr.mxu0 0.0
    %2651 = vmatpush1.msra.mxu0 0.0
    %2652 = vmatprep.subr.mxu0 0.0
    %2653 = vmatpush1.msra.mxu0 0.0
    %2654 = vmatprep.subr.mxu0 0.0
    %2655 = vmatpush1.msra.mxu0 0.0
    %2656 = vmatprep.subr.mxu0 0.0
    %2657 = vmatpush1.msra.mxu0 0.0
    %2658 = vmatprep.subr.mxu0 0.0
    %2659 = vmatpush1.msra.mxu0 0.0
    %2660 = vmatprep.subr.mxu0 0.0
    %2661 = vmatpush1.msra.mxu0 0.0
    %2662 = vmatprep.subr.mxu0 0.0
    %2663 = vmatpush1.msra.mxu0 0.0
    %2664 = vmatprep.subr.mxu0 0.0
    %2665 = vmatpush1.msra.mxu0 0.0
    %2666 = vmatprep.subr.mxu0 0.0
    %2667 = vmatpush1.msra.mxu0 0.0
    %2668 = vmatprep.subr.mxu0 0.0
    %2669 = vmatpush1.msra.mxu0 0.0
    %2670 = vmatprep.subr.mxu0 0.0
    %2671 = vmatpush1.msra.mxu0 0.0
    %2672 = vmatprep.subr.mxu0 0.0
    %2673 = vmatpush1.msra.mxu0 0.0
    %2674 = vmatprep.subr.mxu0 0.0
    %2675 = vmatpush1.msra.mxu0 0.0
    %2676 = vmatprep.subr.mxu0 0.0
    %2677 = vmatpush1.msra.mxu0 0.0
    %2678 = vmatprep.subr.mxu0 0.0
    %2679 = vmatpush1.msra.mxu0 0.0
    %2680 = vmatprep.mubr.f32.mxu0 0.0
    %2681 = vmatmul.mubr.f32.gmra.mrb[0].mxu0 %v2614
    %v2682 = vpop.f32.mrb[0].mxu0
    %v2683 = vadd.f32 %v2610, %v2682
    %v2684 = vpop.f32.mrb[0].mxu0
    %2685 = vdwg.mxu0
    %vm2686 = vcmask 50176
    %2687 = vst.msk [vmem:[#allocation2] sm:$0x3] %vm2686, %v2683
    // Predicated region
    $region14: #{tpu_custom_call.1} parent=1 // pred_check
      _
    $region15: #{tpu_custom_call.1} parent=1 // pred_check_branch
      %2689 = sbr.rel (0) target = $region17
    $region16: #{tpu_custom_call.1} parent=1 // pred_region
      %s2691 = ssub.s32 32, 32
      %2692 = vsyncadd [#allocation3], %s2691
      %s2694 = sshll.u32 [#allocation2], 4
      %s2695 = int_to_ptr.vmem [resolvable:$true] %s2694
      %2697 = dma.vmem_to_hbm [thread:$0]  %s2695, 32, %s3, [#allocation3]
    $region17: #{tpu_custom_call.1} parent=1 // pred_fallthru
      _
    // Predicated region
    $region18: #{tpu_custom_call.1} parent=1 // pred_check
      _
    $region19: #{tpu_custom_call.1} parent=1 // pred_check_branch
      %2699 = sbr.rel (0) target = $region21
    $region20: #{tpu_custom_call.1} parent=1 // pred_region
      %2700 = dma.done [#allocation3], 32
    $region21: #{tpu_custom_call.1} parent=1 // pred_fallthru
      _
    %2701 = vsyncpa [#allocation3], 1

</llo_original>
